<compile_context>
chip_gen: v5e
topology: v5e:2x2
jax: 0.10.0
libtpu: 0.0.40
codegen_flags: <defaults>
</compile_context>

<pallas_src>
import jax
import jax.numpy as jnp
import numpy as np
from jax.experimental import pallas as pl
from jax.experimental.pallas import tpu as pltpu


def _round_up(a, b):
    return (a + b - 1) // b * b


def _softplus(z):
    # Numerically stable softplus, identical in gating and reference.
    return jnp.maximum(z, 0.0) + jnp.log1p(jnp.exp(-jnp.abs(z)))


# ---------------------------------------------------------------------------
# Gating (plain XLA, f32): g + noise*softplus(z), noisy top-k keep, exact softmax.
# Output is tiny ([B, E]); keeping it out of the kernel frees VMEM for big tiles.
# ---------------------------------------------------------------------------
def _compute_gates(x, noise, wg, bg, wn, bn, top_k):
    E = wg.shape[1]
    NEG = jnp.float32(-1e38)
    xf = x.astype(jnp.float32)
    g = jnp.dot(xf, wg.astype(jnp.float32),
                precision=jax.lax.Precision.HIGHEST) + jnp.reshape(bg, (1, E))
    z = jnp.dot(xf, wn.astype(jnp.float32),
                precision=jax.lax.Precision.HIGHEST) + jnp.reshape(bn, (1, E))
    H = g + jnp.reshape(noise, (1, E)).astype(jnp.float32) * _softplus(z)

    col = jnp.arange(E)[None, :]
    keep = jnp.full_like(H, NEG)
    work = H
    for _ in range(top_k):            # top_k is small: unrolled
        m = jnp.max(work, axis=1, keepdims=True)
        is_max = work == m
        first = jnp.min(jnp.where(is_max, col, E), axis=1, keepdims=True)
        sel = col == first
        keep = jnp.where(sel, H, keep)
        work = jnp.where(sel, NEG, work)
    # Exact softmax: dropped experts underflow to exactly 0.
    return jax.nn.softmax(keep, axis=1)                       # [B, E] f32


# ---------------------------------------------------------------------------
# Expert-compute kernel: one (batch tile, Dout tile, expert) grid step.
# ---------------------------------------------------------------------------
def _moe_expert_kernel(g_ref, x_ref, we_ref, be_ref, o_ref):
    e = pl.program_id(2)

    @pl.when(e == 0)
    def _zero():
        o_ref[...] = jnp.zeros_like(o_ref)

    w_e = g_ref[0]                                            # [tb, 1] f32 gate column
    y = jnp.dot(x_ref[...], we_ref[0],
                preferred_element_type=jnp.float32) + be_ref[0]   # [tb, tn] f32
    # Hard-mask dropped experts so a bf16 overflow in an unselected expert can
    # never poison the output via 0 * inf = NaN (mirrors the sparse control flow).
    o_ref[...] += jnp.where(w_e > 0.0, w_e * y, 0.0)


def _pick_tiles_and_vmem(B, D, Dout, compute_dtype):
    """Generation-aware tile sizes and VMEM budget from actual buffer sizes."""
    cap = 128 << 20
    try:
        info = pltpu.get_tpu_info()
        cap = int(getattr(info, "vmem_capacity_bytes", cap) or cap)
    except Exception:
        pass
    if cap <= (64 << 20):            # v7x-class TensorCore (64 MiB VMEM)
        tb_t, tn_t = 384, 256
    else:                            # v5e / v6e (128 MiB VMEM)
        tb_t, tn_t = 512, 512
    tb = max(8, min(tb_t, _round_up(B, 8)))
    tn = max(128, min(tn_t, _round_up(Dout, 128)))

    wbytes = jnp.dtype(compute_dtype).itemsize
    # Double-buffered pipeline working set (inputs + resident f32 output block).
    need = 2 * (tb * D * wbytes        # x tile (bf16)
                + tb * 4               # gate column
                + D * tn * wbytes      # expert weight tile (bf16)
                + tn * 4               # expert bias tile
                + tb * tn * 4)         # f32 output block
    vmem_limit = min(int(need * 1.25) + (4 << 20), int(cap * 0.9))
    return tb, tn, vmem_limit


def _prepare_expert_params(we, be, Np, compute_dtype):
    # NOTE: in production, call this ONCE and cache the result — re-casting /
    # re-padding the full expert weights every forward costs as much HBM traffic
    # as the kernel's own weight streaming.
    E, D, Dout = we.shape
    we_p = jnp.pad(we.astype(compute_dtype), ((0, 0), (0, 0), (0, Np - Dout)))
    be_p = jnp.pad(be.astype(jnp.float32), ((0, 0), (0, Np - Dout))).reshape(E, 1, Np)
    return we_p, be_p


def sgmoe_forward(x, noise, wg, bg, wn, bn, we, be, *, top_k,
                  tb=None, tn=None, compute_dtype=jnp.bfloat16):
    """MoE forward. x:[B,D]; wg/wn:[D,E]; bg/bn:[1,E]; we:[E,D,Dout]; be:[E,Dout]."""
    B, D = x.shape
    E, Dw, Dout = we.shape
    assert Dw == D and 1 <= top_k <= E

    tb_auto, tn_auto, vmem_limit = _pick_tiles_and_vmem(B, D, Dout, compute_dtype)
    tb = tb or tb_auto
    tn = tn or tn_auto
    Bp = _round_up(B, tb)
    Np = _round_up(Dout, tn)

    # Gating in plain XLA f32; padded rows get all-zero gates (sliced off later).
    G = _compute_gates(x, noise, wg, bg, wn, bn, top_k)        # [B, E]
    G_p = jnp.pad(G, ((0, Bp - B), (0, 0)))                    # [Bp, E]
    GT = jnp.transpose(G_p).reshape(E, Bp, 1)                  # gate columns per expert

    # bf16 activations / weights for the MXU (half the HBM->VMEM bytes).
    x_p = jnp.pad(x.astype(compute_dtype), ((0, Bp - B), (0, 0)))
    we_p, be_p = _prepare_expert_params(we, be, Np, compute_dtype)

    grid = (Bp // tb, Np // tn, E)

    out = pl.pallas_call(
        _moe_expert_kernel,
        out_shape=jax.ShapeDtypeStruct((Bp, Np), jnp.float32),
        grid_spec=pltpu.PrefetchScalarGridSpec(
            num_scalar_prefetch=0,
            grid=grid,
            in_specs=[
                pl.BlockSpec((1, tb, 1), lambda i, j, e: (e, i, 0)),    # gate column
                pl.BlockSpec((tb, D), lambda i, j, e: (i, 0)),          # x tile (bf16)
                pl.BlockSpec((1, D, tn), lambda i, j, e: (e, 0, j)),    # expert weights
                pl.BlockSpec((1, 1, tn), lambda i, j, e: (e, 0, j)),    # expert bias
            ],
            out_specs=pl.BlockSpec((tb, tn), lambda i, j, e: (i, j)),   # resident f32 acc
        ),
        compiler_params=pltpu.CompilerParams(
            dimension_semantics=("parallel", "parallel", "arbitrary"),
            vmem_limit_bytes=vmem_limit,
        ),
    )(GT, x_p, we_p, be_p)

    return out[:B, :Dout]


# ---------------------------------------------------------------------------
# Pure-JAX reference mirroring the PyTorch forward (same compute dtypes).
# ---------------------------------------------------------------------------
def sgmoe_reference(x, noise, wg, bg, wn, bn, we, be, *, top_k,
                    compute_dtype=jnp.bfloat16):
    NEG = -1e38
    E = we.shape[0]
    g = jnp.dot(x, wg, precision=jax.lax.Precision.HIGHEST) + bg
    z = jnp.dot(x, wn, precision=jax.lax.Precision.HIGHEST) + bn
    H = g + jnp.reshape(noise, (1, E)) * _softplus(z)
    col = jnp.arange(E)[None, :]
    keep = jnp.full_like(H, NEG)
    work = H
    for _ in range(top_k):
        m = jnp.max(work, axis=1, keepdims=True)
        is_max = work == m
        first = jnp.min(jnp.where(is_max, col, E), axis=1, keepdims=True)
        sel = col == first
        keep = jnp.where(sel, H, keep)
        work = jnp.where(sel, NEG, work)
    G = jax.nn.softmax(keep, axis=1)                           # 0 for dropped experts
    eo = jnp.einsum('bd,edo->beo', x.astype(compute_dtype), we.astype(compute_dtype),
                    preferred_element_type=jnp.float32) + be[None, :, :].astype(jnp.float32)
    return jnp.sum(G[:, :, None] * eo, axis=1)


if __name__ == "__main__":
    # Small shapes; B and Dout deliberately NOT tile multiples to exercise padding.
    B, D, Dout = 200, 128, 384
    E, TOP_K = 4, 2

    key = jax.random.PRNGKey(0)
    ks = jax.random.split(key, 8)
    x     = jax.random.normal(ks[0], (B, D), dtype=jnp.float32)
    noise = jax.random.normal(ks[1], (1, E), dtype=jnp.float32)   # torch.randn(nexperts)
    wg    = jax.random.normal(ks[2], (D, E), dtype=jnp.float32) / np.sqrt(D)
    bg    = jax.random.normal(ks[3], (1, E), dtype=jnp.float32) * 0.1
    wn    = jax.random.normal(ks[4], (D, E), dtype=jnp.float32) / np.sqrt(D)
    bn    = jax.random.normal(ks[5], (1, E), dtype=jnp.float32) * 0.1
    we    = jax.random.normal(ks[6], (E, D, Dout), dtype=jnp.float32) / np.sqrt(D)
    be    = jax.random.normal(ks[7], (E, Dout), dtype=jnp.float32) * 0.1

    out = sgmoe_forward(x, noise, wg, bg, wn, bn, we, be, top_k=TOP_K)
    out = jax.block_until_ready(out)

    ref = sgmoe_reference(x, noise, wg, bg, wn, bn, we, be, top_k=TOP_K)
    np.testing.assert_allclose(np.asarray(out), np.asarray(ref), rtol=5e-3, atol=5e-3)

    print("KERNEL_OK")
</pallas_src>

<mosaic_0001>
module attributes {stable_mosaic.version = 11 : i64} {
  func.func @_moe_expert_kernel(%arg0: i32, %arg1: i32, %arg2: i32, %arg3: memref<1x200x1xf32, #tpu.memory_space<vmem>>, %arg4: memref<200x128xbf16, #tpu.memory_space<vmem>>, %arg5: memref<1x128x384xbf16, #tpu.memory_space<vmem>>, %arg6: memref<1x1x384xf32, #tpu.memory_space<vmem>>, %arg7: memref<200x384xf32, #tpu.memory_space<vmem>>) attributes {dimension_semantics = [#tpu.dimension_semantics<parallel>, #tpu.dimension_semantics<parallel>, #tpu.dimension_semantics<arbitrary>], iteration_bounds = array<i64: 1, 1, 4>, scalar_prefetch = 0 : i64, scratch_operands = 0 : i64, tpu.core_type = #tpu.core_type<tc>, window_params = [{transform_indices = @transform_0, window_bounds = array<i64: 1, 200, 1>}, {transform_indices = @transform_1, window_bounds = array<i64: 200, 128>}, {transform_indices = @transform_2, window_bounds = array<i64: 1, 128, 384>}, {transform_indices = @transform_3, window_bounds = array<i64: 1, 1, 384>}, {transform_indices = @transform_4, window_bounds = array<i64: 200, 384>}]} {
    %c0_i32 = arith.constant 0 : i32
    %0 = arith.cmpi eq, %arg2, %c0_i32 : i32
    %1 = arith.extui %0 : i1 to i32
    %c0_i32_0 = arith.constant 0 : i32
    %2 = arith.cmpi ne, %1, %c0_i32_0 : i32
    scf.if %2 {
      %cst_17 = arith.constant 0.000000e+00 : f32
      %24 = vector.broadcast %cst_17 : f32 to vector<200x384xf32>
      %c0_18 = arith.constant 0 : index
      %c0_19 = arith.constant 0 : index
      %25 = vector.load %arg7[%c0_18, %c0_19] : memref<200x384xf32, #tpu.memory_space<vmem>>, vector<200x384xf32>
      tpu.vector_store %arg7[%c0_18, %c0_19], %24 {strides = array<i32>} : memref<200x384xf32, #tpu.memory_space<vmem>>, vector<200x384xf32>,
    } else {
    }
    %c0 = arith.constant 0 : index
    %c0_1 = arith.constant 0 : index
    %c0_2 = arith.constant 0 : index
    %3 = vector.load %arg3[%c0, %c0_1, %c0_2] : memref<1x200x1xf32, #tpu.memory_space<vmem>>, vector<1x200x1xf32>
    %4 = vector.shape_cast %3 : vector<1x200x1xf32> to vector<200x1xf32>
    %c0_3 = arith.constant 0 : index
    %c0_4 = arith.constant 0 : index
    %5 = vector.load %arg4[%c0_3, %c0_4] : memref<200x128xbf16, #tpu.memory_space<vmem>>, vector<200x128xbf16>
    %c0_5 = arith.constant 0 : index
    %c0_6 = arith.constant 0 : index
    %c0_7 = arith.constant 0 : index
    %6 = vector.load %arg5[%c0_5, %c0_6, %c0_7] : memref<1x128x384xbf16, #tpu.memory_space<vmem>>, vector<1x128x384xbf16>
    %7 = vector.shape_cast %6 : vector<1x128x384xbf16> to vector<128x384xbf16>
    %cst = arith.constant dense<0.000000e+00> : vector<200x384xf32>
    %8 = tpu.matmul %5, %7, %cst {dimension_numbers = #tpu.dot_dimension_numbers<[1], [0], [0], [1], [0, 0, 1, 1], [], []>} : vector<200x128xbf16>, vector<128x384xbf16>, vector<200x384xf32> -> vector<200x384xf32>
    %c0_8 = arith.constant 0 : index
    %c0_9 = arith.constant 0 : index
    %c0_10 = arith.constant 0 : index
    %9 = vector.load %arg6[%c0_8, %c0_9, %c0_10] : memref<1x1x384xf32, #tpu.memory_space<vmem>>, vector<1x1x384xf32>
    %10 = vector.shape_cast %9 : vector<1x1x384xf32> to vector<1x384xf32>
    %11 = vector.broadcast %10 : vector<1x384xf32> to vector<200x384xf32>
    %12 = arith.addf %8, %11 : vector<200x384xf32>
    %c0_11 = arith.constant 0 : index
    %c0_12 = arith.constant 0 : index
    %13 = vector.load %arg7[%c0_11, %c0_12] : memref<200x384xf32, #tpu.memory_space<vmem>>, vector<200x384xf32>
    %cst_13 = arith.constant 0.000000e+00 : f32
    %14 = vector.broadcast %cst_13 : f32 to vector<200x1xf32>
    %15 = arith.cmpf ogt, %4, %14 : vector<200x1xf32>
    %16 = vector.broadcast %4 : vector<200x1xf32> to vector<200x384xf32>
    %17 = arith.mulf %16, %12 : vector<200x384xf32>
    %cst_14 = arith.constant 0.000000e+00 : f32
    %18 = vector.shape_cast %15 : vector<200x1xi1> to vector<200x1xi1>
    %19 = vector.broadcast %18 : vector<200x1xi1> to vector<200x384xi1>
    %20 = vector.broadcast %cst_14 : f32 to vector<200x384xf32>
    %21 = arith.select %19, %17, %20 : vector<200x384xi1>, vector<200x384xf32>
    %22 = arith.addf %13, %21 : vector<200x384xf32>
    %c0_15 = arith.constant 0 : index
    %c0_16 = arith.constant 0 : index
    %23 = vector.load %arg7[%c0_15, %c0_16] : memref<200x384xf32, #tpu.memory_space<vmem>>, vector<200x384xf32>
    tpu.vector_store %arg7[%c0_15, %c0_16], %22 {strides = array<i32>} : memref<200x384xf32, #tpu.memory_space<vmem>>, vector<200x384xf32>,
    return
  }
  func.func @transform_0(%arg0: i32, %arg1: i32, %arg2: i32) -> (i32, i32, i32) {
    %c0_i32 = arith.constant 0 : i32
    %c0_i32_0 = arith.constant 0 : i32
    return %arg2, %arg0, %c0_i32 : i32, i32, i32
  }
  func.func @transform_1(%arg0: i32, %arg1: i32, %arg2: i32) -> (i32, i32) {
    %c0_i32 = arith.constant 0 : i32
    %c0_i32_0 = arith.constant 0 : i32
    return %arg0, %c0_i32 : i32, i32
  }
  func.func @transform_2(%arg0: i32, %arg1: i32, %arg2: i32) -> (i32, i32, i32) {
    %c0_i32 = arith.constant 0 : i32
    %c0_i32_0 = arith.constant 0 : i32
    return %arg2, %c0_i32, %arg1 : i32, i32, i32
  }
  func.func @transform_3(%arg0: i32, %arg1: i32, %arg2: i32) -> (i32, i32, i32) {
    %c0_i32 = arith.constant 0 : i32
    %c0_i32_0 = arith.constant 0 : i32
    return %arg2, %c0_i32, %arg1 : i32, i32, i32
  }
  func.func @transform_4(%arg0: i32, %arg1: i32, %arg2: i32) -> (i32, i32) {
    %c0_i32 = arith.constant 0 : i32
    return %arg0, %arg1 : i32, i32
  }
}

</mosaic_0001>

<llo_original>
// kernel: tpu_custom_call.1
$region0: #{tpu_custom_call.1}
  #allocation0 [shape = 'u32[]', space=smem, size = 0x4, offset = 0x4, fixed_abs, tag = 'smem constant byte address 0x4 - core index']
  #allocation1 [shape = 'u32[72,128]{1,0:T(1,128)}', space=vmem, size = 0x9000, scoped, tag = 'internal scratch']
  %s0 = inlined_call_operand.vmem [shape: f32[4,200,1], index: 0, kind: input, shape index: {}]
  %s1 = inlined_call_operand.hbm [shape: bf16[200,128], index: 1, kind: input, shape index: {}]
  %s2 = inlined_call_operand.vmem [shape: bf16[4,128,384], index: 2, kind: input, shape index: {}]
  %s3 = inlined_call_operand.vmem [shape: f32[4,1,384], index: 3, kind: input, shape index: {}]
  %s4 = inlined_call_operand.hbm [shape: f32[200,384], index: 4, kind: output, shape index: {}]
  %s5 = sld [smem:[#allocation0]]
  $region57: #{tpu_custom_call.1} parent=0
    _
  %s7 = ssub.s32 1, %s5
  %s8 = scalar_select 0, %s7, %s5
  $region1: #{tpu_custom_call.1} parent=0
    #allocation2 [shape = 'u8[51200]{0}', space=vmem, size = 0xc800, scoped, tag = 'input window, operand 1, single buffered']
    #allocation3 [shape = 's32[2]{0}', space=sflag, size = 0x8, scoped, tag = 'scoped memory for tpu_custom_call.1']
    #allocation4 [shape = 's32[2]{0}', space=sflag, size = 0x8, scoped, tag = 'scoped memory for tpu_custom_call.1']
    #allocation5 [shape = 'u8[307200]{0}', space=vmem, size = 0x4b000, scoped, tag = 'output window, operand 0, single buffered']
    %9 = vsyncpa [#allocation3], 0
    %10 = vsyncpa [#allocation4], 0
    loop: start=0, step=1, limit=6
    $region2: #{tpu_custom_call.1} parent=1 // loop_pre_header
      _
    $region3: #{tpu_custom_call.1} parent=1 // loop_header
      %s12 = sphi 0, %s16
      %p13 = scmp.ge.s32.totalorder %s12, 6
      %s19 = sphi 0, %s38
      %s20 = sphi 0, %s34
      %s21 = sphi 0, %s30
      %s22 = sphi 0, %s19
      %s23 = sphi 0, %s20
      %s24 = sphi 0, %s21
      %s25 = sphi 0, %s22
      %s26 = sphi 0, %s23
      %s27 = sphi 0, %s24
      %s43 = sphi 0, %s45
      %s46 = sphi 0, %s43
      %s47 = sphi 0, %s46
      %s63 = sphi 0, %s47
      %s69 = sphi 0, %s71
      %s72 = sphi 0, %s69
      %s73 = sphi 0, %s72
      %s89 = sphi 0, %s73
      %s97 = sphi 0, %s99
      %s100 = sphi 0, %s97
      %s101 = sphi 0, %s100
      %s117 = sphi 0, %s101
      %s125 = sphi 0, %s127
      %s128 = sphi 0, %s125
      %s129 = sphi 0, %s128
      %s145 = sphi 0, %s129
      %s153 = sphi 0, %s155
      %s156 = sphi 0, %s153
      %s157 = sphi 0, %s156
      %s173 = sphi 0, %s157
    $region4: #{tpu_custom_call.1} parent=1 // loop_header_branch
      %15 = sbr.rel (%p13) target = $region8
    $region5: #{tpu_custom_call.1} parent=1 // loop_body
      %s17 = ssub.s32 %s12, 1
      %s18 = ssub.s32 %s12, 2
      %s28 = sadd.s32 1, %s21
      %p29 = scmp.ge.s32.totalorder %s28, 4
      %s30 = scalar_select %p29, 0, %s28
      %s31 = sadd.s32 1, %s20
      %s32 = scalar_select %p29, %s31, %s20
      %p33 = scmp.ge.s32.totalorder %s32, 1
      %s34 = scalar_select %p33, 0, %s32
      %s35 = sadd.s32 1, %s19
      %s36 = scalar_select %p33, %s35, %s19
      %p37 = scmp.ge.s32.totalorder %s36, 1
      %s38 = scalar_select %p37, 0, %s36
      %s39 = ssub.s32 %s21, %s30
      %s40 = ssub.s32 %s19, %s38
      %s41 = sor.u32 %s39, %s40
      %p42 = scmp.eq.s32.totalorder %s41, 0
      %s44 = sadd.s32 %s43, 1
      %s45 = scalar_select %p42, %s43, %s44
      %p48 = pneg %p42
      %p49 = scmp.eq.s32.totalorder %s12, 3
      %p50 = por %p48, %p49
      %p51 = scmp.ne.s32.totalorder %s43, %s46
      %p52 = scmp.eq.s32.totalorder %s12, 0
      %p53 = por %p51, %p52
      %p54 = scmp.ne.s32.totalorder %s43, %s46
      %p55 = scmp.eq.s32.totalorder %s17, 3
      %p56 = por %p54, %p55
      %p57 = scmp.ne.s32.totalorder %s46, %s47
      %p58 = scmp.eq.s32.totalorder %s17, 0
      %p59 = por %p57, %p58
      %p60 = scmp.ne.s32.totalorder %s46, %s47
      %p61 = scmp.eq.s32.totalorder %s18, 3
      %p62 = por %p60, %p61
      %p64 = scmp.ne.s32.totalorder %s47, %s63
      %p65 = scmp.eq.s32.totalorder %s18, 0
      %p66 = por %p64, %p65
      %s67 = ssub.s32 %s19, %s38
      %p68 = scmp.eq.s32.totalorder %s67, 0
      %s70 = sadd.s32 %s69, 1
      %s71 = scalar_select %p68, %s69, %s70
      %p74 = pneg %p68
      %p75 = scmp.eq.s32.totalorder %s12, 3
      %p76 = por %p74, %p75
      %p77 = scmp.ne.s32.totalorder %s69, %s72
      %p78 = scmp.eq.s32.totalorder %s12, 0
      %p79 = por %p77, %p78
      %p80 = scmp.ne.s32.totalorder %s69, %s72
      %p81 = scmp.eq.s32.totalorder %s17, 3
      %p82 = por %p80, %p81
      %p83 = scmp.ne.s32.totalorder %s72, %s73
      %p84 = scmp.eq.s32.totalorder %s17, 0
      %p85 = por %p83, %p84
      %p86 = scmp.ne.s32.totalorder %s72, %s73
      %p87 = scmp.eq.s32.totalorder %s18, 3
      %p88 = por %p86, %p87
      %p90 = scmp.ne.s32.totalorder %s73, %s89
      %p91 = scmp.eq.s32.totalorder %s18, 0
      %p92 = por %p90, %p91
      %s93 = ssub.s32 %s21, %s30
      %s94 = ssub.s32 %s20, %s34
      %s95 = sor.u32 %s93, %s94
      %p96 = scmp.eq.s32.totalorder %s95, 0
      %s98 = sadd.s32 %s97, 1
      %s99 = scalar_select %p96, %s97, %s98
      %p102 = pneg %p96
      %p103 = scmp.eq.s32.totalorder %s12, 3
      %p104 = por %p102, %p103
      %p105 = scmp.ne.s32.totalorder %s97, %s100
      %p106 = scmp.eq.s32.totalorder %s12, 0
      %p107 = por %p105, %p106
      %p108 = scmp.ne.s32.totalorder %s97, %s100
      %p109 = scmp.eq.s32.totalorder %s17, 3
      %p110 = por %p108, %p109
      %p111 = scmp.ne.s32.totalorder %s100, %s101
      %p112 = scmp.eq.s32.totalorder %s17, 0
      %p113 = por %p111, %p112
      %p114 = scmp.ne.s32.totalorder %s100, %s101
      %p115 = scmp.eq.s32.totalorder %s18, 3
      %p116 = por %p114, %p115
      %p118 = scmp.ne.s32.totalorder %s101, %s117
      %p119 = scmp.eq.s32.totalorder %s18, 0
      %p120 = por %p118, %p119
      %s121 = ssub.s32 %s21, %s30
      %s122 = ssub.s32 %s20, %s34
      %s123 = sor.u32 %s121, %s122
      %p124 = scmp.eq.s32.totalorder %s123, 0
      %s126 = sadd.s32 %s125, 1
      %s127 = scalar_select %p124, %s125, %s126
      %p130 = pneg %p124
      %p131 = scmp.eq.s32.totalorder %s12, 3
      %p132 = por %p130, %p131
      %p133 = scmp.ne.s32.totalorder %s125, %s128
      %p134 = scmp.eq.s32.totalorder %s12, 0
      %p135 = por %p133, %p134
      %p136 = scmp.ne.s32.totalorder %s125, %s128
      %p137 = scmp.eq.s32.totalorder %s17, 3
      %p138 = por %p136, %p137
      %p139 = scmp.ne.s32.totalorder %s128, %s129
      %p140 = scmp.eq.s32.totalorder %s17, 0
      %p141 = por %p139, %p140
      %p142 = scmp.ne.s32.totalorder %s128, %s129
      %p143 = scmp.eq.s32.totalorder %s18, 3
      %p144 = por %p142, %p143
      %p146 = scmp.ne.s32.totalorder %s129, %s145
      %p147 = scmp.eq.s32.totalorder %s18, 0
      %p148 = por %p146, %p147
      %s149 = ssub.s32 %s19, %s38
      %s150 = ssub.s32 %s20, %s34
      %s151 = sor.u32 %s149, %s150
      %p152 = scmp.eq.s32.totalorder %s151, 0
      %s154 = sadd.s32 %s153, 1
      %s155 = scalar_select %p152, %s153, %s154
      %p158 = pneg %p152
      %p159 = scmp.eq.s32.totalorder %s12, 3
      %p160 = por %p158, %p159
      %p161 = scmp.ne.s32.totalorder %s153, %s156
      %p162 = scmp.eq.s32.totalorder %s12, 0
      %p163 = por %p161, %p162
      %p164 = scmp.ne.s32.totalorder %s153, %s156
      %p165 = scmp.eq.s32.totalorder %s17, 3
      %p166 = por %p164, %p165
      %p167 = scmp.ne.s32.totalorder %s156, %s157
      %p168 = scmp.eq.s32.totalorder %s17, 0
      %p169 = por %p167, %p168
      %p170 = scmp.ne.s32.totalorder %s156, %s157
      %p171 = scmp.eq.s32.totalorder %s18, 3
      %p172 = por %p170, %p171
      %p174 = scmp.ne.s32.totalorder %s157, %s173
      %p175 = scmp.eq.s32.totalorder %s18, 0
      %p176 = por %p174, %p175
      %p177 = scmp.le.s32.totalorder 1, %s12
      %p178 = scmp.lt.s32.totalorder %s12, 5
      %p179 = pnand %p177, %p178
      %p180 = pneg %p179
      // Predicated region
      $region9: #{tpu_custom_call.1} parent=5 // pred_check
        _
      $region10: #{tpu_custom_call.1} parent=5 // pred_check_branch
        %182 = sbr.rel (%p179) target = $region12
      $region11: #{tpu_custom_call.1} parent=5 // pred_region
        %s183 = ssub.s32 %s12, 1
        // Predicated region
        $region13: #{tpu_custom_call.1} parent=11 // pred_check
          %p184 = pneg %p85
        $region14: #{tpu_custom_call.1} parent=11 // pred_check_branch
          %186 = sbr.rel (%p184) target = $region16
        $region15: #{tpu_custom_call.1} parent=11 // pred_region
          %s187 = smul.u32 25, %s22
          %189 = vsyncadd [#allocation3], 0
          %s190 = smul.addr %s187, 4
          %s191 = scalar_lea.hbm %s1, %s190
          %s192 = sshll.u32 %s191, 4
          %s193 = int_to_ptr.hbm [resolvable:$true] %s192
          %s194 = sshll.u32 [#allocation2], 4
          %s195 = int_to_ptr.vmem [resolvable:$true] %s194
          %200 = dma.hbm_to_vmem [thread:$0]  %s193, 1600, %s195, [#allocation3], 64, 64, 4
        $region16: #{tpu_custom_call.1} parent=11 // pred_fallthru
          _
      $region12: #{tpu_custom_call.1} parent=5 // pred_fallthru
        _
      %p201 = scmp.lt.s32.totalorder %s12, 4
      // Predicated region
      $region17: #{tpu_custom_call.1} parent=5 // pred_check
        %p202 = pneg %p201
      $region18: #{tpu_custom_call.1} parent=5 // pred_check_branch
        %204 = sbr.rel (%p202) target = $region20
      $region19: #{tpu_custom_call.1} parent=5 // pred_region
        // Predicated region
        $region21: #{tpu_custom_call.1} parent=19 // pred_check
          %p205 = pneg %p53
        $region22: #{tpu_custom_call.1} parent=19 // pred_check_branch
          %207 = sbr.rel (%p205) target = $region24
        $region23: #{tpu_custom_call.1} parent=19 // pred_region
          %s208 = smul.u32 25, %s19
          %p209 = scmp.lt.s32.totalorder %s21, 3
          %s210 = scalar_select %p209, %s21, 3
          %p211 = scmp.lt.s32.totalorder %s208, 24
          %s212 = scalar_select %p211, %s208, 24
          %s213 = smul.addr %s210, 25
          %s214 = sadd.s32 %s212, %s213
          %s215 = smul.addr %s214, 8
          %s216 = scalar_lea.vmem %s0, %s215
          %s217 = smul.u32 25, %s19
        $region24: #{tpu_custom_call.1} parent=19 // pred_fallthru
          _
        // Predicated region
        $region25: #{tpu_custom_call.1} parent=19 // pred_check
          %p218 = pneg %p107
        $region26: #{tpu_custom_call.1} parent=19 // pred_check_branch
          %220 = sbr.rel (%p218) target = $region28
        $region27: #{tpu_custom_call.1} parent=19 // pred_region
          %s221 = smul.u32 3, %s20
          %p222 = scmp.lt.s32.totalorder %s21, 3
          %s223 = scalar_select %p222, %s21, 3
          %p224 = scmp.lt.s32.totalorder %s221, 2
          %s225 = scalar_select %p224, %s221, 2
          %s226 = smul.addr %s223, 48
          %s227 = sadd.s32 %s225, %s226
          %s228 = smul.addr %s227, 4
          %s229 = scalar_lea.vmem %s2, %s228
          %s230 = smul.u32 3, %s20
        $region28: #{tpu_custom_call.1} parent=19 // pred_fallthru
          _
        // Predicated region
        $region29: #{tpu_custom_call.1} parent=19 // pred_check
          %p231 = pneg %p135
        $region30: #{tpu_custom_call.1} parent=19 // pred_check_branch
          %233 = sbr.rel (%p231) target = $region32
        $region31: #{tpu_custom_call.1} parent=19 // pred_region
          %s234 = smul.u32 3, %s20
          %p235 = scmp.lt.s32.totalorder %s21, 3
          %s236 = scalar_select %p235, %s21, 3
          %p237 = scmp.lt.s32.totalorder %s234, 2
          %s238 = scalar_select %p237, %s234, 2
          %s239 = smul.addr %s236, 3
          %s240 = sadd.s32 %s238, %s239
          %s241 = scalar_lea.vmem %s3, %s240
          %s242 = smul.u32 3, %s20
        $region32: #{tpu_custom_call.1} parent=19 // pred_fallthru
          _
      $region20: #{tpu_custom_call.1} parent=5 // pred_fallthru
        _
      %p243 = scmp.le.s32.totalorder 1, %s12
      %p244 = scmp.lt.s32.totalorder %s12, 5
      %p245 = pnand %p243, %p244
      %p246 = pneg %p245
      // Predicated region
      $region33: #{tpu_custom_call.1} parent=5 // pred_check
        _
      $region34: #{tpu_custom_call.1} parent=5 // pred_check_branch
        %248 = sbr.rel (%p245) target = $region36
      $region35: #{tpu_custom_call.1} parent=5 // pred_region
        %s249 = ssub.s32 %s12, 1
        // Predicated region
        $region37: #{tpu_custom_call.1} parent=35 // pred_check
          %p250 = pneg %p85
        $region38: #{tpu_custom_call.1} parent=35 // pred_check_branch
          %252 = sbr.rel (%p250) target = $region40
        $region39: #{tpu_custom_call.1} parent=35 // pred_region
          %254 = dma.done [#allocation3], 1600
        $region40: #{tpu_custom_call.1} parent=35 // pred_fallthru
          _
        %s255 = smul.u32 25, %s22
        %p256 = scmp.lt.s32.totalorder %s24, 3
        %s257 = scalar_select %p256, %s24, 3
        %p258 = scmp.lt.s32.totalorder %s255, 24
        %s259 = scalar_select %p258, %s255, 24
        %s260 = smul.addr %s257, 25
        %s261 = sadd.s32 %s259, %s260
        %s262 = smul.addr %s261, 8
        %s263 = scalar_lea.vmem %s0, %s262
        %p264 = pneg %p59
        %p265 = pneg %p56
        %p266 = pneg %p85
        %p267 = pneg %p82
        %s268 = smul.u32 3, %s23
        %p269 = scmp.lt.s32.totalorder %s24, 3
        %s270 = scalar_select %p269, %s24, 3
        %p271 = scmp.lt.s32.totalorder %s268, 2
        %s272 = scalar_select %p271, %s268, 2
        %s273 = smul.addr %s270, 48
        %s274 = sadd.s32 %s272, %s273
        %s275 = smul.addr %s274, 4
        %s276 = scalar_lea.vmem %s2, %s275
        %p277 = pneg %p113
        %p278 = pneg %p110
        %s279 = smul.u32 3, %s23
        %p280 = scmp.lt.s32.totalorder %s24, 3
        %s281 = scalar_select %p280, %s24, 3
        %p282 = scmp.lt.s32.totalorder %s279, 2
        %s283 = scalar_select %p282, %s279, 2
        %s284 = smul.addr %s281, 3
        %s285 = sadd.s32 %s283, %s284
        %s286 = scalar_lea.vmem %s3, %s285
        %p287 = pneg %p141
        %p288 = pneg %p138
        %p289 = pneg %p169
        %p290 = pneg %p166
        %s291 = smul.u32 25, %s22
        %p292 = scmp.lt.s32.totalorder %s24, 3
        %s293 = scalar_select %p292, %s24, 3
        %p294 = scmp.lt.s32.totalorder %s291, 24
        %s295 = scalar_select %p294, %s291, 24
        %s296 = smul.addr %s293, 25
        %s297 = sadd.s32 %s295, %s296
        %s298 = smul.addr %s297, 8
        %s299 = scalar_lea.vmem %s0, %s298
        %s300 = smul.u32 25, %s22
        %s301 = smul.u32 25, %s22
        %s302 = smul.u32 3, %s23
        %p303 = scmp.lt.s32.totalorder %s24, 3
        %s304 = scalar_select %p303, %s24, 3
        %p305 = scmp.lt.s32.totalorder %s302, 2
        %s306 = scalar_select %p305, %s302, 2
        %s307 = smul.addr %s304, 48
        %s308 = sadd.s32 %s306, %s307
        %s309 = smul.addr %s308, 4
        %s310 = scalar_lea.vmem %s2, %s309
        %s311 = smul.u32 3, %s23
        %s312 = smul.u32 3, %s23
        %p313 = scmp.lt.s32.totalorder %s24, 3
        %s314 = scalar_select %p313, %s24, 3
        %p315 = scmp.lt.s32.totalorder %s312, 2
        %s316 = scalar_select %p315, %s312, 2
        %s317 = smul.addr %s314, 3
        %s318 = sadd.s32 %s316, %s317
        %s319 = scalar_lea.vmem %s3, %s318
        %s320 = smul.u32 3, %s23
        %s321 = smul.u32 25, %s22
        %s322 = smul.u32 3, %s23
        %p323 = scmp.eq.s32.totalorder %s24, 0
        // Predicated region
        $region41: #{tpu_custom_call.1} parent=35 // pred_check
          %p324 = pneg %p323
        $region42: #{tpu_custom_call.1} parent=35 // pred_check_branch
          %326 = sbr.rel (%p324) target = $region44
        $region43: #{tpu_custom_call.1} parent=35 // pred_region
          %327 = vst [vmem:[#allocation5] sm:$0xff] 0.0
          %328 = vst [vmem:[#allocation5 + $0x8] sm:$0xff] 0.0
          %329 = vst [vmem:[#allocation5 + $0x10] sm:$0xff] 0.0
          %330 = vst [vmem:[#allocation5 + $0x18] sm:$0xff] 0.0
          %331 = vst [vmem:[#allocation5 + $0x20] sm:$0xff] 0.0
          %332 = vst [vmem:[#allocation5 + $0x28] sm:$0xff] 0.0
          %333 = vst [vmem:[#allocation5 + $0x30] sm:$0xff] 0.0
          %334 = vst [vmem:[#allocation5 + $0x38] sm:$0xff] 0.0
          %335 = vst [vmem:[#allocation5 + $0x40] sm:$0xff] 0.0
          %336 = vst [vmem:[#allocation5 + $0x48] sm:$0xff] 0.0
          %337 = vst [vmem:[#allocation5 + $0x50] sm:$0xff] 0.0
          %338 = vst [vmem:[#allocation5 + $0x58] sm:$0xff] 0.0
          %339 = vst [vmem:[#allocation5 + $0x60] sm:$0xff] 0.0
          %340 = vst [vmem:[#allocation5 + $0x68] sm:$0xff] 0.0
          %341 = vst [vmem:[#allocation5 + $0x70] sm:$0xff] 0.0
          %342 = vst [vmem:[#allocation5 + $0x78] sm:$0xff] 0.0
          %343 = vst [vmem:[#allocation5 + $0x80] sm:$0xff] 0.0
          %344 = vst [vmem:[#allocation5 + $0x88] sm:$0xff] 0.0
          %345 = vst [vmem:[#allocation5 + $0x90] sm:$0xff] 0.0
          %346 = vst [vmem:[#allocation5 + $0x98] sm:$0xff] 0.0
          %347 = vst [vmem:[#allocation5 + $0xa0] sm:$0xff] 0.0
          %348 = vst [vmem:[#allocation5 + $0xa8] sm:$0xff] 0.0
          %349 = vst [vmem:[#allocation5 + $0xb0] sm:$0xff] 0.0
          %350 = vst [vmem:[#allocation5 + $0xb8] sm:$0xff] 0.0
          %351 = vst [vmem:[#allocation5 + $0xc0] sm:$0xff] 0.0
          %352 = vst [vmem:[#allocation5 + $0xc8] sm:$0xff] 0.0
          %353 = vst [vmem:[#allocation5 + $0xd0] sm:$0xff] 0.0
          %354 = vst [vmem:[#allocation5 + $0xd8] sm:$0xff] 0.0
          %355 = vst [vmem:[#allocation5 + $0xe0] sm:$0xff] 0.0
          %356 = vst [vmem:[#allocation5 + $0xe8] sm:$0xff] 0.0
          %357 = vst [vmem:[#allocation5 + $0xf0] sm:$0xff] 0.0
          %358 = vst [vmem:[#allocation5 + $0xf8] sm:$0xff] 0.0
          %359 = vst [vmem:[#allocation5 + $0x100] sm:$0xff] 0.0
          %360 = vst [vmem:[#allocation5 + $0x108] sm:$0xff] 0.0
          %361 = vst [vmem:[#allocation5 + $0x110] sm:$0xff] 0.0
          %362 = vst [vmem:[#allocation5 + $0x118] sm:$0xff] 0.0
          %363 = vst [vmem:[#allocation5 + $0x120] sm:$0xff] 0.0
          %364 = vst [vmem:[#allocation5 + $0x128] sm:$0xff] 0.0
          %365 = vst [vmem:[#allocation5 + $0x130] sm:$0xff] 0.0
          %366 = vst [vmem:[#allocation5 + $0x138] sm:$0xff] 0.0
          %367 = vst [vmem:[#allocation5 + $0x140] sm:$0xff] 0.0
          %368 = vst [vmem:[#allocation5 + $0x148] sm:$0xff] 0.0
          %369 = vst [vmem:[#allocation5 + $0x150] sm:$0xff] 0.0
          %370 = vst [vmem:[#allocation5 + $0x158] sm:$0xff] 0.0
          %371 = vst [vmem:[#allocation5 + $0x160] sm:$0xff] 0.0
          %372 = vst [vmem:[#allocation5 + $0x168] sm:$0xff] 0.0
          %373 = vst [vmem:[#allocation5 + $0x170] sm:$0xff] 0.0
          %374 = vst [vmem:[#allocation5 + $0x178] sm:$0xff] 0.0
          %375 = vst [vmem:[#allocation5 + $0x180] sm:$0xff] 0.0
          %376 = vst [vmem:[#allocation5 + $0x188] sm:$0xff] 0.0
          %377 = vst [vmem:[#allocation5 + $0x190] sm:$0xff] 0.0
          %378 = vst [vmem:[#allocation5 + $0x198] sm:$0xff] 0.0
          %379 = vst [vmem:[#allocation5 + $0x1a0] sm:$0xff] 0.0
          %380 = vst [vmem:[#allocation5 + $0x1a8] sm:$0xff] 0.0
          %381 = vst [vmem:[#allocation5 + $0x1b0] sm:$0xff] 0.0
          %382 = vst [vmem:[#allocation5 + $0x1b8] sm:$0xff] 0.0
          %383 = vst [vmem:[#allocation5 + $0x1c0] sm:$0xff] 0.0
          %384 = vst [vmem:[#allocation5 + $0x1c8] sm:$0xff] 0.0
          %385 = vst [vmem:[#allocation5 + $0x1d0] sm:$0xff] 0.0
          %386 = vst [vmem:[#allocation5 + $0x1d8] sm:$0xff] 0.0
          %387 = vst [vmem:[#allocation5 + $0x1e0] sm:$0xff] 0.0
          %388 = vst [vmem:[#allocation5 + $0x1e8] sm:$0xff] 0.0
          %389 = vst [vmem:[#allocation5 + $0x1f0] sm:$0xff] 0.0
          %390 = vst [vmem:[#allocation5 + $0x1f8] sm:$0xff] 0.0
          %391 = vst [vmem:[#allocation5 + $0x200] sm:$0xff] 0.0
          %392 = vst [vmem:[#allocation5 + $0x208] sm:$0xff] 0.0
          %393 = vst [vmem:[#allocation5 + $0x210] sm:$0xff] 0.0
          %394 = vst [vmem:[#allocation5 + $0x218] sm:$0xff] 0.0
          %395 = vst [vmem:[#allocation5 + $0x220] sm:$0xff] 0.0
          %396 = vst [vmem:[#allocation5 + $0x228] sm:$0xff] 0.0
          %397 = vst [vmem:[#allocation5 + $0x230] sm:$0xff] 0.0
          %398 = vst [vmem:[#allocation5 + $0x238] sm:$0xff] 0.0
          %399 = vst [vmem:[#allocation5 + $0x240] sm:$0xff] 0.0
          %400 = vst [vmem:[#allocation5 + $0x248] sm:$0xff] 0.0
          %401 = vst [vmem:[#allocation5 + $0x250] sm:$0xff] 0.0
        $region44: #{tpu_custom_call.1} parent=35 // pred_fallthru
          _
        %v402 = vld [vmem:[%s299] sm:$0xff]
        %v403 = vld [vmem:[%s299 + $0x8] sm:$0xff]
        %v404 = vld [vmem:[%s299 + $0x10] sm:$0xff]
        %v405 = vld [vmem:[%s299 + $0x18] sm:$0xff]
        %v406 = vld [vmem:[%s299 + $0x20] sm:$0xff]
        %v407 = vld [vmem:[%s299 + $0x28] sm:$0xff]
        %v408 = vld [vmem:[%s299 + $0x30] sm:$0xff]
        %v409 = vld [vmem:[%s299 + $0x38] sm:$0xff]
        %v410 = vld [vmem:[%s299 + $0x40] sm:$0xff]
        %v411 = vld [vmem:[%s299 + $0x48] sm:$0xff]
        %v412 = vld [vmem:[%s299 + $0x50] sm:$0xff]
        %v413 = vld [vmem:[%s299 + $0x58] sm:$0xff]
        %v414 = vld [vmem:[%s299 + $0x60] sm:$0xff]
        %v415 = vld [vmem:[%s299 + $0x68] sm:$0xff]
        %v416 = vld [vmem:[%s299 + $0x70] sm:$0xff]
        %v417 = vld [vmem:[%s299 + $0x78] sm:$0xff]
        %v418 = vld [vmem:[%s299 + $0x80] sm:$0xff]
        %v419 = vld [vmem:[%s299 + $0x88] sm:$0xff]
        %v420 = vld [vmem:[%s299 + $0x90] sm:$0xff]
        %v421 = vld [vmem:[%s299 + $0x98] sm:$0xff]
        %v422 = vld [vmem:[%s299 + $0xa0] sm:$0xff]
        %v423 = vld [vmem:[%s299 + $0xa8] sm:$0xff]
        %v424 = vld [vmem:[%s299 + $0xb0] sm:$0xff]
        %v425 = vld [vmem:[%s299 + $0xb8] sm:$0xff]
        %v426 = vld [vmem:[%s299 + $0xc0] sm:$0xff]
        %v427 = vld [vmem:[#allocation2] sm:$0xf]
        %v428 = vld [vmem:[#allocation2 + $0x4] sm:$0xf]
        %v429 = vld [vmem:[#allocation2 + $0x8] sm:$0xf]
        %v430 = vld [vmem:[#allocation2 + $0xc] sm:$0xf]
        %v431 = vld [vmem:[#allocation2 + $0x10] sm:$0xf]
        %v432 = vld [vmem:[#allocation2 + $0x14] sm:$0xf]
        %v433 = vld [vmem:[#allocation2 + $0x18] sm:$0xf]
        %v434 = vld [vmem:[#allocation2 + $0x1c] sm:$0xf]
        %v435 = vld [vmem:[#allocation2 + $0x20] sm:$0xf]
        %v436 = vld [vmem:[#allocation2 + $0x24] sm:$0xf]
        %v437 = vld [vmem:[#allocation2 + $0x28] sm:$0xf]
        %v438 = vld [vmem:[#allocation2 + $0x2c] sm:$0xf]
        %v439 = vld [vmem:[#allocation2 + $0x30] sm:$0xf]
        %v440 = vld [vmem:[#allocation2 + $0x34] sm:$0xf]
        %v441 = vld [vmem:[#allocation2 + $0x38] sm:$0xf]
        %v442 = vld [vmem:[#allocation2 + $0x3c] sm:$0xf]
        %v443 = vld [vmem:[#allocation2 + $0x40] sm:$0xf]
        %v444 = vld [vmem:[#allocation2 + $0x44] sm:$0xf]
        %v445 = vld [vmem:[#allocation2 + $0x48] sm:$0xf]
        %v446 = vld [vmem:[#allocation2 + $0x4c] sm:$0xf]
        %v447 = vld [vmem:[#allocation2 + $0x50] sm:$0xf]
        %v448 = vld [vmem:[#allocation2 + $0x54] sm:$0xf]
        %v449 = vld [vmem:[#allocation2 + $0x58] sm:$0xf]
        %v450 = vld [vmem:[#allocation2 + $0x5c] sm:$0xf]
        %v451 = vld [vmem:[#allocation2 + $0x60] sm:$0xf]
        %v452 = vld [vmem:[%s310] sm:$0xff]
        %v453 = vld [vmem:[%s310 + $0x8] sm:$0xf]
        %v454 = vld [vmem:[%s310 + $0xc] sm:$0xff]
        %v455 = vld [vmem:[%s310 + $0x14] sm:$0xf]
        %v456 = vld [vmem:[%s310 + $0x18] sm:$0xff]
        %v457 = vld [vmem:[%s310 + $0x20] sm:$0xf]
        %v458 = vld [vmem:[%s310 + $0x24] sm:$0xff]
        %v459 = vld [vmem:[%s310 + $0x2c] sm:$0xf]
        %v460 = vld [vmem:[%s310 + $0x30] sm:$0xff]
        %v461 = vld [vmem:[%s310 + $0x38] sm:$0xf]
        %v462 = vld [vmem:[%s310 + $0x3c] sm:$0xff]
        %v463 = vld [vmem:[%s310 + $0x44] sm:$0xf]
        %v464 = vld [vmem:[%s310 + $0x48] sm:$0xff]
        %v465 = vld [vmem:[%s310 + $0x50] sm:$0xf]
        %v466 = vld [vmem:[%s310 + $0x54] sm:$0xff]
        %v467 = vld [vmem:[%s310 + $0x5c] sm:$0xf]
        %v468 = vld [vmem:[%s310 + $0x60] sm:$0xff]
        %v469 = vld [vmem:[%s310 + $0x68] sm:$0xf]
        %v470 = vld [vmem:[%s310 + $0x6c] sm:$0xff]
        %v471 = vld [vmem:[%s310 + $0x74] sm:$0xf]
        %v472 = vld [vmem:[%s310 + $0x78] sm:$0xff]
        %v473 = vld [vmem:[%s310 + $0x80] sm:$0xf]
        %v474 = vld [vmem:[%s310 + $0x84] sm:$0xff]
        %v475 = vld [vmem:[%s310 + $0x8c] sm:$0xf]
        %v476 = vld [vmem:[%s310 + $0x90] sm:$0xff]
        %v477 = vld [vmem:[%s310 + $0x98] sm:$0xf]
        %v478 = vld [vmem:[%s310 + $0x9c] sm:$0xff]
        %v479 = vld [vmem:[%s310 + $0xa4] sm:$0xf]
        %v480 = vld [vmem:[%s310 + $0xa8] sm:$0xff]
        %v481 = vld [vmem:[%s310 + $0xb0] sm:$0xf]
        %v482 = vld [vmem:[%s310 + $0xb4] sm:$0xff]
        %v483 = vld [vmem:[%s310 + $0xbc] sm:$0xf]
        %v484 = vld [vmem:[%s319] sm:$0x7]
        %v486 = vperm.slane %v484, 0
        %v487 = vperm.slane %v484, 1
        %v488 = vperm.slane %v484, 2
        %v517 = vunpack.c.l.b16 %v427
        %v518 = vunpack.c.l.b16 %v428
        %v519 = vunpack.c.l.b16 %v429
        %v520 = vunpack.c.l.b16 %v430
        %v521 = vunpack.c.l.b16 %v431
        %v522 = vunpack.c.l.b16 %v432
        %v523 = vunpack.c.l.b16 %v433
        %v524 = vunpack.c.l.b16 %v434
        %v525 = vunpack.c.l.b16 %v435
        %v526 = vunpack.c.l.b16 %v436
        %v527 = vunpack.c.l.b16 %v437
        %v528 = vunpack.c.l.b16 %v438
        %v529 = vunpack.c.l.b16 %v439
        %v530 = vunpack.c.l.b16 %v440
        %v531 = vunpack.c.l.b16 %v441
        %v532 = vunpack.c.l.b16 %v442
        %v533 = vunpack.c.l.b16 %v443
        %v534 = vunpack.c.l.b16 %v444
        %v535 = vunpack.c.l.b16 %v445
        %v536 = vunpack.c.l.b16 %v446
        %v537 = vunpack.c.l.b16 %v447
        %v538 = vunpack.c.l.b16 %v448
        %v539 = vunpack.c.l.b16 %v449
        %v540 = vunpack.c.l.b16 %v450
        %v541 = vunpack.c.l.b16 %v451
        %v542 = vpack.c.b16 %v518, %v517
        %v543 = vpack.c.b16 %v520, %v519
        %v544 = vpack.c.b16 %v522, %v521
        %v545 = vpack.c.b16 %v524, %v523
        %v546 = vpack.c.b16 %v526, %v525
        %v547 = vpack.c.b16 %v528, %v527
        %v548 = vpack.c.b16 %v530, %v529
        %v549 = vpack.c.b16 %v532, %v531
        %v550 = vpack.c.b16 %v534, %v533
        %v551 = vpack.c.b16 %v536, %v535
        %v552 = vpack.c.b16 %v538, %v537
        %v553 = vpack.c.b16 %v540, %v539
        %v554 = vpack.c.b16 %v541, %v541
        %v600 = vunpack.c.l.b16 %v452
        %v601 = vunpack.c.h.b16 %v452
        %v602 = vunpack.c.l.b16 %v453
        %v603 = vunpack.c.l.b16 %v454
        %v604 = vunpack.c.h.b16 %v454
        %v605 = vunpack.c.l.b16 %v455
        %v606 = vunpack.c.l.b16 %v456
        %v607 = vunpack.c.h.b16 %v456
        %v608 = vunpack.c.l.b16 %v457
        %v609 = vunpack.c.l.b16 %v458
        %v610 = vunpack.c.h.b16 %v458
        %v611 = vunpack.c.l.b16 %v459
        %v612 = vunpack.c.l.b16 %v460
        %v613 = vunpack.c.h.b16 %v460
        %v614 = vunpack.c.l.b16 %v461
        %v615 = vunpack.c.l.b16 %v462
        %v616 = vunpack.c.h.b16 %v462
        %v617 = vunpack.c.l.b16 %v463
        %v618 = vunpack.c.l.b16 %v464
        %v619 = vunpack.c.h.b16 %v464
        %v620 = vunpack.c.l.b16 %v465
        %v621 = vunpack.c.l.b16 %v466
        %v622 = vunpack.c.h.b16 %v466
        %v623 = vunpack.c.l.b16 %v467
        %v624 = vunpack.c.l.b16 %v468
        %v625 = vunpack.c.h.b16 %v468
        %v626 = vunpack.c.l.b16 %v469
        %v627 = vunpack.c.l.b16 %v470
        %v628 = vunpack.c.h.b16 %v470
        %v629 = vunpack.c.l.b16 %v471
        %v630 = vunpack.c.l.b16 %v472
        %v631 = vunpack.c.h.b16 %v472
        %v632 = vunpack.c.l.b16 %v473
        %v633 = vunpack.c.l.b16 %v474
        %v634 = vunpack.c.h.b16 %v474
        %v635 = vunpack.c.l.b16 %v475
        %v636 = vunpack.c.l.b16 %v476
        %v637 = vunpack.c.h.b16 %v476
        %v638 = vunpack.c.l.b16 %v477
        %v639 = vunpack.c.l.b16 %v478
        %v640 = vunpack.c.h.b16 %v478
        %v641 = vunpack.c.l.b16 %v479
        %v642 = vunpack.c.l.b16 %v480
        %v643 = vunpack.c.h.b16 %v480
        %v644 = vunpack.c.l.b16 %v481
        %v645 = vunpack.c.l.b16 %v482
        %v646 = vunpack.c.h.b16 %v482
        %v647 = vunpack.c.l.b16 %v483
        %v648 = vpack.c.b16 %v603, %v600
        %v649 = vpack.c.b16 %v604, %v601
        %v650 = vpack.c.b16 %v605, %v602
        %v651 = vpack.c.b16 %v609, %v606
        %v652 = vpack.c.b16 %v610, %v607
        %v653 = vpack.c.b16 %v611, %v608
        %v654 = vpack.c.b16 %v615, %v612
        %v655 = vpack.c.b16 %v616, %v613
        %v656 = vpack.c.b16 %v617, %v614
        %v657 = vpack.c.b16 %v621, %v618
        %v658 = vpack.c.b16 %v622, %v619
        %v659 = vpack.c.b16 %v623, %v620
        %v660 = vpack.c.b16 %v627, %v624
        %v661 = vpack.c.b16 %v628, %v625
        %v662 = vpack.c.b16 %v629, %v626
        %v663 = vpack.c.b16 %v633, %v630
        %v664 = vpack.c.b16 %v634, %v631
        %v665 = vpack.c.b16 %v635, %v632
        %v666 = vpack.c.b16 %v639, %v636
        %v667 = vpack.c.b16 %v640, %v637
        %v668 = vpack.c.b16 %v641, %v638
        %v669 = vpack.c.b16 %v645, %v642
        %v670 = vpack.c.b16 %v646, %v643
        %v671 = vpack.c.b16 %v647, %v644
        %696 = vmatpush.bf16.msra.mxu0 %v669
        %697 = vmatpush.bf16.msra.mxu0 %v666
        %698 = vmatpush.bf16.msra.mxu0 %v663
        %699 = vmatpush.bf16.msra.mxu0 %v660
        %700 = vmatpush.bf16.msra.mxu0 %v657
        %701 = vmatpush.bf16.msra.mxu0 %v654
        %702 = vmatpush.bf16.msra.mxu0 %v651
        %703 = vmatpush.bf16.msra.mxu0 %v648
        %704 = vmatmul.bf16.gmra.mxu0 %v542
        %v705 = vpop.f32.mrf.mxu0
        %v706 = vadd.f32 %v486, %v705
        %v707 = vpop.f32.mrf.mxu0
        %v708 = vadd.f32 %v486, %v707
        %709 = vmatmul.bf16.gmra.mxu0 %v543
        %v710 = vpop.f32.mrf.mxu0
        %v711 = vadd.f32 %v486, %v710
        %v712 = vpop.f32.mrf.mxu0
        %v713 = vadd.f32 %v486, %v712
        %714 = vmatmul.bf16.gmra.mxu0 %v544
        %v715 = vpop.f32.mrf.mxu0
        %v716 = vadd.f32 %v486, %v715
        %v717 = vpop.f32.mrf.mxu0
        %v718 = vadd.f32 %v486, %v717
        %719 = vmatmul.bf16.gmra.mxu0 %v545
        %v720 = vpop.f32.mrf.mxu0
        %v721 = vadd.f32 %v486, %v720
        %v722 = vpop.f32.mrf.mxu0
        %v723 = vadd.f32 %v486, %v722
        %724 = vmatmul.bf16.gmra.mxu0 %v546
        %v725 = vpop.f32.mrf.mxu0
        %v726 = vadd.f32 %v486, %v725
        %v727 = vpop.f32.mrf.mxu0
        %v728 = vadd.f32 %v486, %v727
        %729 = vmatmul.bf16.gmra.mxu0 %v547
        %v730 = vpop.f32.mrf.mxu0
        %v731 = vadd.f32 %v486, %v730
        %v732 = vpop.f32.mrf.mxu0
        %v733 = vadd.f32 %v486, %v732
        %734 = vmatmul.bf16.gmra.mxu0 %v548
        %v735 = vpop.f32.mrf.mxu0
        %v736 = vadd.f32 %v486, %v735
        %v737 = vpop.f32.mrf.mxu0
        %v738 = vadd.f32 %v486, %v737
        %739 = vmatmul.bf16.gmra.mxu0 %v549
        %v740 = vpop.f32.mrf.mxu0
        %v741 = vadd.f32 %v486, %v740
        %v742 = vpop.f32.mrf.mxu0
        %v743 = vadd.f32 %v486, %v742
        %744 = vmatmul.bf16.gmra.mxu0 %v550
        %v745 = vpop.f32.mrf.mxu0
        %v746 = vadd.f32 %v486, %v745
        %v747 = vpop.f32.mrf.mxu0
        %v748 = vadd.f32 %v486, %v747
        %749 = vmatmul.bf16.gmra.mxu0 %v551
        %v750 = vpop.f32.mrf.mxu0
        %v751 = vadd.f32 %v486, %v750
        %v752 = vpop.f32.mrf.mxu0
        %v753 = vadd.f32 %v486, %v752
        %754 = vmatmul.bf16.gmra.mxu0 %v552
        %v755 = vpop.f32.mrf.mxu0
        %v756 = vadd.f32 %v486, %v755
        %v757 = vpop.f32.mrf.mxu0
        %v758 = vadd.f32 %v486, %v757
        %759 = vmatmul.bf16.gmra.mxu0 %v553
        %v760 = vpop.f32.mrf.mxu0
        %v761 = vadd.f32 %v486, %v760
        %v762 = vpop.f32.mrf.mxu0
        %v763 = vadd.f32 %v486, %v762
        %764 = vmatmul.bf16.gmra.mxu0 %v554
        %v765 = vpop.f32.mrf.mxu0
        %v766 = vadd.f32 %v486, %v765
        %v767 = vpop.f32.mrf.mxu0
        %768 = vdwg.mxu0
        %769 = vmatpush.bf16.msra.mxu0 %v670
        %770 = vmatpush.bf16.msra.mxu0 %v667
        %771 = vmatpush.bf16.msra.mxu0 %v664
        %772 = vmatpush.bf16.msra.mxu0 %v661
        %773 = vmatpush.bf16.msra.mxu0 %v658
        %774 = vmatpush.bf16.msra.mxu0 %v655
        %775 = vmatpush.bf16.msra.mxu0 %v652
        %776 = vmatpush.bf16.msra.mxu0 %v649
        %777 = vmatmul.bf16.gmra.mxu0 %v542
        %v778 = vpop.f32.mrf.mxu0
        %v779 = vadd.f32 %v487, %v778
        %v780 = vpop.f32.mrf.mxu0
        %v781 = vadd.f32 %v487, %v780
        %782 = vmatmul.bf16.gmra.mxu0 %v543
        %v783 = vpop.f32.mrf.mxu0
        %v784 = vadd.f32 %v487, %v783
        %v785 = vpop.f32.mrf.mxu0
        %v786 = vadd.f32 %v487, %v785
        %787 = vmatmul.bf16.gmra.mxu0 %v544
        %v788 = vpop.f32.mrf.mxu0
        %v789 = vadd.f32 %v487, %v788
        %v790 = vpop.f32.mrf.mxu0
        %v791 = vadd.f32 %v487, %v790
        %792 = vmatmul.bf16.gmra.mxu0 %v545
        %v793 = vpop.f32.mrf.mxu0
        %v794 = vadd.f32 %v487, %v793
        %v795 = vpop.f32.mrf.mxu0
        %v796 = vadd.f32 %v487, %v795
        %797 = vmatmul.bf16.gmra.mxu0 %v546
        %v798 = vpop.f32.mrf.mxu0
        %v799 = vadd.f32 %v487, %v798
        %v800 = vpop.f32.mrf.mxu0
        %v801 = vadd.f32 %v487, %v800
        %802 = vmatmul.bf16.gmra.mxu0 %v547
        %v803 = vpop.f32.mrf.mxu0
        %v804 = vadd.f32 %v487, %v803
        %v805 = vpop.f32.mrf.mxu0
        %v806 = vadd.f32 %v487, %v805
        %807 = vmatmul.bf16.gmra.mxu0 %v548
        %v808 = vpop.f32.mrf.mxu0
        %v809 = vadd.f32 %v487, %v808
        %v810 = vpop.f32.mrf.mxu0
        %v811 = vadd.f32 %v487, %v810
        %812 = vmatmul.bf16.gmra.mxu0 %v549
        %v813 = vpop.f32.mrf.mxu0
        %v814 = vadd.f32 %v487, %v813
        %v815 = vpop.f32.mrf.mxu0
        %v816 = vadd.f32 %v487, %v815
        %817 = vmatmul.bf16.gmra.mxu0 %v550
        %v818 = vpop.f32.mrf.mxu0
        %v819 = vadd.f32 %v487, %v818
        %v820 = vpop.f32.mrf.mxu0
        %v821 = vadd.f32 %v487, %v820
        %822 = vmatmul.bf16.gmra.mxu0 %v551
        %v823 = vpop.f32.mrf.mxu0
        %v824 = vadd.f32 %v487, %v823
        %v825 = vpop.f32.mrf.mxu0
        %v826 = vadd.f32 %v487, %v825
        %827 = vmatmul.bf16.gmra.mxu0 %v552
        %v828 = vpop.f32.mrf.mxu0
        %v829 = vadd.f32 %v487, %v828
        %v830 = vpop.f32.mrf.mxu0
        %v831 = vadd.f32 %v487, %v830
        %832 = vmatmul.bf16.gmra.mxu0 %v553
        %v833 = vpop.f32.mrf.mxu0
        %v834 = vadd.f32 %v487, %v833
        %v835 = vpop.f32.mrf.mxu0
        %v836 = vadd.f32 %v487, %v835
        %837 = vmatmul.bf16.gmra.mxu0 %v554
        %v838 = vpop.f32.mrf.mxu0
        %v839 = vadd.f32 %v487, %v838
        %v840 = vpop.f32.mrf.mxu0
        %841 = vdwg.mxu0
        %842 = vmatpush.bf16.msra.mxu0 %v671
        %843 = vmatpush.bf16.msra.mxu0 %v668
        %844 = vmatpush.bf16.msra.mxu0 %v665
        %845 = vmatpush.bf16.msra.mxu0 %v662
        %846 = vmatpush.bf16.msra.mxu0 %v659
        %847 = vmatpush.bf16.msra.mxu0 %v656
        %848 = vmatpush.bf16.msra.mxu0 %v653
        %849 = vmatpush.bf16.msra.mxu0 %v650
        %850 = vmatmul.bf16.gmra.mxu0 %v542
        %v851 = vpop.f32.mrf.mxu0
        %v852 = vadd.f32 %v488, %v851
        %v853 = vpop.f32.mrf.mxu0
        %v854 = vadd.f32 %v488, %v853
        %855 = vmatmul.bf16.gmra.mxu0 %v543
        %v856 = vpop.f32.mrf.mxu0
        %v857 = vadd.f32 %v488, %v856
        %v858 = vpop.f32.mrf.mxu0
        %v859 = vadd.f32 %v488, %v858
        %860 = vmatmul.bf16.gmra.mxu0 %v544
        %v861 = vpop.f32.mrf.mxu0
        %v862 = vadd.f32 %v488, %v861
        %v863 = vpop.f32.mrf.mxu0
        %v864 = vadd.f32 %v488, %v863
        %865 = vmatmul.bf16.gmra.mxu0 %v545
        %v866 = vpop.f32.mrf.mxu0
        %v867 = vadd.f32 %v488, %v866
        %v868 = vpop.f32.mrf.mxu0
        %v869 = vadd.f32 %v488, %v868
        %870 = vmatmul.bf16.gmra.mxu0 %v546
        %v871 = vpop.f32.mrf.mxu0
        %v872 = vadd.f32 %v488, %v871
        %v873 = vpop.f32.mrf.mxu0
        %v874 = vadd.f32 %v488, %v873
        %875 = vmatmul.bf16.gmra.mxu0 %v547
        %v876 = vpop.f32.mrf.mxu0
        %v877 = vadd.f32 %v488, %v876
        %v878 = vpop.f32.mrf.mxu0
        %v879 = vadd.f32 %v488, %v878
        %880 = vmatmul.bf16.gmra.mxu0 %v548
        %v881 = vpop.f32.mrf.mxu0
        %v882 = vadd.f32 %v488, %v881
        %v883 = vpop.f32.mrf.mxu0
        %v884 = vadd.f32 %v488, %v883
        %885 = vmatmul.bf16.gmra.mxu0 %v549
        %v886 = vpop.f32.mrf.mxu0
        %v887 = vadd.f32 %v488, %v886
        %v888 = vpop.f32.mrf.mxu0
        %v889 = vadd.f32 %v488, %v888
        %890 = vmatmul.bf16.gmra.mxu0 %v550
        %v891 = vpop.f32.mrf.mxu0
        %v892 = vadd.f32 %v488, %v891
        %v893 = vpop.f32.mrf.mxu0
        %v894 = vadd.f32 %v488, %v893
        %895 = vmatmul.bf16.gmra.mxu0 %v551
        %v896 = vpop.f32.mrf.mxu0
        %v897 = vadd.f32 %v488, %v896
        %v898 = vpop.f32.mrf.mxu0
        %v899 = vadd.f32 %v488, %v898
        %900 = vmatmul.bf16.gmra.mxu0 %v552
        %v901 = vpop.f32.mrf.mxu0
        %v902 = vadd.f32 %v488, %v901
        %v903 = vpop.f32.mrf.mxu0
        %v904 = vadd.f32 %v488, %v903
        %905 = vmatmul.bf16.gmra.mxu0 %v553
        %v906 = vpop.f32.mrf.mxu0
        %v907 = vadd.f32 %v488, %v906
        %v908 = vpop.f32.mrf.mxu0
        %v909 = vadd.f32 %v488, %v908
        %910 = vmatmul.bf16.gmra.mxu0 %v554
        %v911 = vpop.f32.mrf.mxu0
        %v912 = vadd.f32 %v488, %v911
        %v913 = vpop.f32.mrf.mxu0
        %914 = vdwg.mxu0
        %v915 = vld [vmem:[#allocation5] sm:$0xff]
        %v916 = vld [vmem:[#allocation5 + $0x8] sm:$0xff]
        %v917 = vld [vmem:[#allocation5 + $0x10] sm:$0xff]
        %v918 = vld [vmem:[#allocation5 + $0x18] sm:$0xff]
        %v919 = vld [vmem:[#allocation5 + $0x20] sm:$0xff]
        %v920 = vld [vmem:[#allocation5 + $0x28] sm:$0xff]
        %v921 = vld [vmem:[#allocation5 + $0x30] sm:$0xff]
        %v922 = vld [vmem:[#allocation5 + $0x38] sm:$0xff]
        %v923 = vld [vmem:[#allocation5 + $0x40] sm:$0xff]
        %v924 = vld [vmem:[#allocation5 + $0x48] sm:$0xff]
        %v925 = vld [vmem:[#allocation5 + $0x50] sm:$0xff]
        %v926 = vld [vmem:[#allocation5 + $0x58] sm:$0xff]
        %v927 = vld [vmem:[#allocation5 + $0x60] sm:$0xff]
        %v928 = vld [vmem:[#allocation5 + $0x68] sm:$0xff]
        %v929 = vld [vmem:[#allocation5 + $0x70] sm:$0xff]
        %v930 = vld [vmem:[#allocation5 + $0x78] sm:$0xff]
        %v931 = vld [vmem:[#allocation5 + $0x80] sm:$0xff]
        %v932 = vld [vmem:[#allocation5 + $0x88] sm:$0xff]
        %v933 = vld [vmem:[#allocation5 + $0x90] sm:$0xff]
        %v934 = vld [vmem:[#allocation5 + $0x98] sm:$0xff]
        %v935 = vld [vmem:[#allocation5 + $0xa0] sm:$0xff]
        %v936 = vld [vmem:[#allocation5 + $0xa8] sm:$0xff]
        %v937 = vld [vmem:[#allocation5 + $0xb0] sm:$0xff]
        %v938 = vld [vmem:[#allocation5 + $0xb8] sm:$0xff]
        %v939 = vld [vmem:[#allocation5 + $0xc0] sm:$0xff]
        %v940 = vld [vmem:[#allocation5 + $0xc8] sm:$0xff]
        %v941 = vld [vmem:[#allocation5 + $0xd0] sm:$0xff]
        %v942 = vld [vmem:[#allocation5 + $0xd8] sm:$0xff]
        %v943 = vld [vmem:[#allocation5 + $0xe0] sm:$0xff]
        %v944 = vld [vmem:[#allocation5 + $0xe8] sm:$0xff]
        %v945 = vld [vmem:[#allocation5 + $0xf0] sm:$0xff]
        %v946 = vld [vmem:[#allocation5 + $0xf8] sm:$0xff]
        %v947 = vld [vmem:[#allocation5 + $0x100] sm:$0xff]
        %v948 = vld [vmem:[#allocation5 + $0x108] sm:$0xff]
        %v949 = vld [vmem:[#allocation5 + $0x110] sm:$0xff]
        %v950 = vld [vmem:[#allocation5 + $0x118] sm:$0xff]
        %v951 = vld [vmem:[#allocation5 + $0x120] sm:$0xff]
        %v952 = vld [vmem:[#allocation5 + $0x128] sm:$0xff]
        %v953 = vld [vmem:[#allocation5 + $0x130] sm:$0xff]
        %v954 = vld [vmem:[#allocation5 + $0x138] sm:$0xff]
        %v955 = vld [vmem:[#allocation5 + $0x140] sm:$0xff]
        %v956 = vld [vmem:[#allocation5 + $0x148] sm:$0xff]
        %v957 = vld [vmem:[#allocation5 + $0x150] sm:$0xff]
        %v958 = vld [vmem:[#allocation5 + $0x158] sm:$0xff]
        %v959 = vld [vmem:[#allocation5 + $0x160] sm:$0xff]
        %v960 = vld [vmem:[#allocation5 + $0x168] sm:$0xff]
        %v961 = vld [vmem:[#allocation5 + $0x170] sm:$0xff]
        %v962 = vld [vmem:[#allocation5 + $0x178] sm:$0xff]
        %v963 = vld [vmem:[#allocation5 + $0x180] sm:$0xff]
        %v964 = vld [vmem:[#allocation5 + $0x188] sm:$0xff]
        %v965 = vld [vmem:[#allocation5 + $0x190] sm:$0xff]
        %v966 = vld [vmem:[#allocation5 + $0x198] sm:$0xff]
        %v967 = vld [vmem:[#allocation5 + $0x1a0] sm:$0xff]
        %v968 = vld [vmem:[#allocation5 + $0x1a8] sm:$0xff]
        %v969 = vld [vmem:[#allocation5 + $0x1b0] sm:$0xff]
        %v970 = vld [vmem:[#allocation5 + $0x1b8] sm:$0xff]
        %v971 = vld [vmem:[#allocation5 + $0x1c0] sm:$0xff]
        %v972 = vld [vmem:[#allocation5 + $0x1c8] sm:$0xff]
        %v973 = vld [vmem:[#allocation5 + $0x1d0] sm:$0xff]
        %v974 = vld [vmem:[#allocation5 + $0x1d8] sm:$0xff]
        %v975 = vld [vmem:[#allocation5 + $0x1e0] sm:$0xff]
        %v976 = vld [vmem:[#allocation5 + $0x1e8] sm:$0xff]
        %v977 = vld [vmem:[#allocation5 + $0x1f0] sm:$0xff]
        %v978 = vld [vmem:[#allocation5 + $0x1f8] sm:$0xff]
        %v979 = vld [vmem:[#allocation5 + $0x200] sm:$0xff]
        %v980 = vld [vmem:[#allocation5 + $0x208] sm:$0xff]
        %v981 = vld [vmem:[#allocation5 + $0x210] sm:$0xff]
        %v982 = vld [vmem:[#allocation5 + $0x218] sm:$0xff]
        %v983 = vld [vmem:[#allocation5 + $0x220] sm:$0xff]
        %v984 = vld [vmem:[#allocation5 + $0x228] sm:$0xff]
        %v985 = vld [vmem:[#allocation5 + $0x230] sm:$0xff]
        %v986 = vld [vmem:[#allocation5 + $0x238] sm:$0xff]
        %v987 = vld [vmem:[#allocation5 + $0x240] sm:$0xff]
        %v988 = vld [vmem:[#allocation5 + $0x248] sm:$0xff]
        %v989 = vld [vmem:[#allocation5 + $0x250] sm:$0xff]
        %vm990 = vcmp.gt.f32.partialorder %v402, 0.0
        %vm991 = vcmp.gt.f32.partialorder %v403, 0.0
        %vm992 = vcmp.gt.f32.partialorder %v404, 0.0
        %vm993 = vcmp.gt.f32.partialorder %v405, 0.0
        %vm994 = vcmp.gt.f32.partialorder %v406, 0.0
        %vm995 = vcmp.gt.f32.partialorder %v407, 0.0
        %vm996 = vcmp.gt.f32.partialorder %v408, 0.0
        %vm997 = vcmp.gt.f32.partialorder %v409, 0.0
        %vm998 = vcmp.gt.f32.partialorder %v410, 0.0
        %vm999 = vcmp.gt.f32.partialorder %v411, 0.0
        %vm1000 = vcmp.gt.f32.partialorder %v412, 0.0
        %vm1001 = vcmp.gt.f32.partialorder %v413, 0.0
        %vm1002 = vcmp.gt.f32.partialorder %v414, 0.0
        %vm1003 = vcmp.gt.f32.partialorder %v415, 0.0
        %vm1004 = vcmp.gt.f32.partialorder %v416, 0.0
        %vm1005 = vcmp.gt.f32.partialorder %v417, 0.0
        %vm1006 = vcmp.gt.f32.partialorder %v418, 0.0
        %vm1007 = vcmp.gt.f32.partialorder %v419, 0.0
        %vm1008 = vcmp.gt.f32.partialorder %v420, 0.0
        %vm1009 = vcmp.gt.f32.partialorder %v421, 0.0
        %vm1010 = vcmp.gt.f32.partialorder %v422, 0.0
        %vm1011 = vcmp.gt.f32.partialorder %v423, 0.0
        %vm1012 = vcmp.gt.f32.partialorder %v424, 0.0
        %vm1013 = vcmp.gt.f32.partialorder %v425, 0.0
        %vm1014 = vcmp.gt.f32.partialorder %v426, 0.0
        %1016 = vset.pattern.permute.xlu0 0
        %1017 = vperm.xlu0 %1016, %v402
        %v1018 = vpop.permute.xlu0 %1017
        %1021 = vset.pattern.permute.xlu0 0
        %1022 = vperm.xlu0 %1021, %v403
        %v1023 = vpop.permute.xlu0 %1022
        %1026 = vset.pattern.permute.xlu0 0
        %1027 = vperm.xlu0 %1026, %v404
        %v1028 = vpop.permute.xlu0 %1027
        %1031 = vset.pattern.permute.xlu0 0
        %1032 = vperm.xlu0 %1031, %v405
        %v1033 = vpop.permute.xlu0 %1032
        %1036 = vset.pattern.permute.xlu0 0
        %1037 = vperm.xlu0 %1036, %v406
        %v1038 = vpop.permute.xlu0 %1037
        %1041 = vset.pattern.permute.xlu0 0
        %1042 = vperm.xlu0 %1041, %v407
        %v1043 = vpop.permute.xlu0 %1042
        %1046 = vset.pattern.permute.xlu0 0
        %1047 = vperm.xlu0 %1046, %v408
        %v1048 = vpop.permute.xlu0 %1047
        %1051 = vset.pattern.permute.xlu0 0
        %1052 = vperm.xlu0 %1051, %v409
        %v1053 = vpop.permute.xlu0 %1052
        %1056 = vset.pattern.permute.xlu0 0
        %1057 = vperm.xlu0 %1056, %v410
        %v1058 = vpop.permute.xlu0 %1057
        %1061 = vset.pattern.permute.xlu0 0
        %1062 = vperm.xlu0 %1061, %v411
        %v1063 = vpop.permute.xlu0 %1062
        %1066 = vset.pattern.permute.xlu0 0
        %1067 = vperm.xlu0 %1066, %v412
        %v1068 = vpop.permute.xlu0 %1067
        %1071 = vset.pattern.permute.xlu0 0
        %1072 = vperm.xlu0 %1071, %v413
        %v1073 = vpop.permute.xlu0 %1072
        %1076 = vset.pattern.permute.xlu0 0
        %1077 = vperm.xlu0 %1076, %v414
        %v1078 = vpop.permute.xlu0 %1077
        %1081 = vset.pattern.permute.xlu0 0
        %1082 = vperm.xlu0 %1081, %v415
        %v1083 = vpop.permute.xlu0 %1082
        %1086 = vset.pattern.permute.xlu0 0
        %1087 = vperm.xlu0 %1086, %v416
        %v1088 = vpop.permute.xlu0 %1087
        %1091 = vset.pattern.permute.xlu0 0
        %1092 = vperm.xlu0 %1091, %v417
        %v1093 = vpop.permute.xlu0 %1092
        %1096 = vset.pattern.permute.xlu0 0
        %1097 = vperm.xlu0 %1096, %v418
        %v1098 = vpop.permute.xlu0 %1097
        %1101 = vset.pattern.permute.xlu0 0
        %1102 = vperm.xlu0 %1101, %v419
        %v1103 = vpop.permute.xlu0 %1102
        %1106 = vset.pattern.permute.xlu0 0
        %1107 = vperm.xlu0 %1106, %v420
        %v1108 = vpop.permute.xlu0 %1107
        %1111 = vset.pattern.permute.xlu0 0
        %1112 = vperm.xlu0 %1111, %v421
        %v1113 = vpop.permute.xlu0 %1112
        %1116 = vset.pattern.permute.xlu0 0
        %1117 = vperm.xlu0 %1116, %v422
        %v1118 = vpop.permute.xlu0 %1117
        %1121 = vset.pattern.permute.xlu0 0
        %1122 = vperm.xlu0 %1121, %v423
        %v1123 = vpop.permute.xlu0 %1122
        %1126 = vset.pattern.permute.xlu0 0
        %1127 = vperm.xlu0 %1126, %v424
        %v1128 = vpop.permute.xlu0 %1127
        %1131 = vset.pattern.permute.xlu0 0
        %1132 = vperm.xlu0 %1131, %v425
        %v1133 = vpop.permute.xlu0 %1132
        %1136 = vset.pattern.permute.xlu0 0
        %1137 = vperm.xlu0 %1136, %v426
        %v1138 = vpop.permute.xlu0 %1137
        %v1140 = vmul.f32 %v1018, %v706
        %v1141 = vmul.f32 %v1018, %v779
        %v1142 = vmul.f32 %v1018, %v852
        %v1143 = vmul.f32 %v1023, %v708
        %v1144 = vmul.f32 %v1023, %v781
        %v1145 = vmul.f32 %v1023, %v854
        %v1146 = vmul.f32 %v1028, %v711
        %v1147 = vmul.f32 %v1028, %v784
        %v1148 = vmul.f32 %v1028, %v857
        %v1149 = vmul.f32 %v1033, %v713
        %v1150 = vmul.f32 %v1033, %v786
        %v1151 = vmul.f32 %v1033, %v859
        %v1152 = vmul.f32 %v1038, %v716
        %v1153 = vmul.f32 %v1038, %v789
        %v1154 = vmul.f32 %v1038, %v862
        %v1155 = vmul.f32 %v1043, %v718
        %v1156 = vmul.f32 %v1043, %v791
        %v1157 = vmul.f32 %v1043, %v864
        %v1158 = vmul.f32 %v1048, %v721
        %v1159 = vmul.f32 %v1048, %v794
        %v1160 = vmul.f32 %v1048, %v867
        %v1161 = vmul.f32 %v1053, %v723
        %v1162 = vmul.f32 %v1053, %v796
        %v1163 = vmul.f32 %v1053, %v869
        %v1164 = vmul.f32 %v1058, %v726
        %v1165 = vmul.f32 %v1058, %v799
        %v1166 = vmul.f32 %v1058, %v872
        %v1167 = vmul.f32 %v1063, %v728
        %v1168 = vmul.f32 %v1063, %v801
        %v1169 = vmul.f32 %v1063, %v874
        %v1170 = vmul.f32 %v1068, %v731
        %v1171 = vmul.f32 %v1068, %v804
        %v1172 = vmul.f32 %v1068, %v877
        %v1173 = vmul.f32 %v1073, %v733
        %v1174 = vmul.f32 %v1073, %v806
        %v1175 = vmul.f32 %v1073, %v879
        %v1176 = vmul.f32 %v1078, %v736
        %v1177 = vmul.f32 %v1078, %v809
        %v1178 = vmul.f32 %v1078, %v882
        %v1179 = vmul.f32 %v1083, %v738
        %v1180 = vmul.f32 %v1083, %v811
        %v1181 = vmul.f32 %v1083, %v884
        %v1182 = vmul.f32 %v1088, %v741
        %v1183 = vmul.f32 %v1088, %v814
        %v1184 = vmul.f32 %v1088, %v887
        %v1185 = vmul.f32 %v1093, %v743
        %v1186 = vmul.f32 %v1093, %v816
        %v1187 = vmul.f32 %v1093, %v889
        %v1188 = vmul.f32 %v1098, %v746
        %v1189 = vmul.f32 %v1098, %v819
        %v1190 = vmul.f32 %v1098, %v892
        %v1191 = vmul.f32 %v1103, %v748
        %v1192 = vmul.f32 %v1103, %v821
        %v1193 = vmul.f32 %v1103, %v894
        %v1194 = vmul.f32 %v1108, %v751
        %v1195 = vmul.f32 %v1108, %v824
        %v1196 = vmul.f32 %v1108, %v897
        %v1197 = vmul.f32 %v1113, %v753
        %v1198 = vmul.f32 %v1113, %v826
        %v1199 = vmul.f32 %v1113, %v899
        %v1200 = vmul.f32 %v1118, %v756
        %v1201 = vmul.f32 %v1118, %v829
        %v1202 = vmul.f32 %v1118, %v902
        %v1203 = vmul.f32 %v1123, %v758
        %v1204 = vmul.f32 %v1123, %v831
        %v1205 = vmul.f32 %v1123, %v904
        %v1206 = vmul.f32 %v1128, %v761
        %v1207 = vmul.f32 %v1128, %v834
        %v1208 = vmul.f32 %v1128, %v907
        %v1209 = vmul.f32 %v1133, %v763
        %v1210 = vmul.f32 %v1133, %v836
        %v1211 = vmul.f32 %v1133, %v909
        %v1212 = vmul.f32 %v1138, %v766
        %v1213 = vmul.f32 %v1138, %v839
        %v1214 = vmul.f32 %v1138, %v912
        %v1215 = vsel %vm990, 1, 0
        %v1216 = vsel %vm991, 1, 0
        %v1217 = vsel %vm992, 1, 0
        %v1218 = vsel %vm993, 1, 0
        %v1219 = vsel %vm994, 1, 0
        %v1220 = vsel %vm995, 1, 0
        %v1221 = vsel %vm996, 1, 0
        %v1222 = vsel %vm997, 1, 0
        %v1223 = vsel %vm998, 1, 0
        %v1224 = vsel %vm999, 1, 0
        %v1225 = vsel %vm1000, 1, 0
        %v1226 = vsel %vm1001, 1, 0
        %v1227 = vsel %vm1002, 1, 0
        %v1228 = vsel %vm1003, 1, 0
        %v1229 = vsel %vm1004, 1, 0
        %v1230 = vsel %vm1005, 1, 0
        %v1231 = vsel %vm1006, 1, 0
        %v1232 = vsel %vm1007, 1, 0
        %v1233 = vsel %vm1008, 1, 0
        %v1234 = vsel %vm1009, 1, 0
        %v1235 = vsel %vm1010, 1, 0
        %v1236 = vsel %vm1011, 1, 0
        %v1237 = vsel %vm1012, 1, 0
        %v1238 = vsel %vm1013, 1, 0
        %v1239 = vsel %vm1014, 1, 0
        %1240 = vset.pattern.permute.xlu0 0
        %1241 = vperm.xlu0 %1240, %v1215
        %v1242 = vpop.permute.xlu0 %1241
        %1243 = vset.pattern.permute.xlu0 0
        %1244 = vperm.xlu0 %1243, %v1216
        %v1245 = vpop.permute.xlu0 %1244
        %1246 = vset.pattern.permute.xlu0 0
        %1247 = vperm.xlu0 %1246, %v1217
        %v1248 = vpop.permute.xlu0 %1247
        %1249 = vset.pattern.permute.xlu0 0
        %1250 = vperm.xlu0 %1249, %v1218
        %v1251 = vpop.permute.xlu0 %1250
        %1252 = vset.pattern.permute.xlu0 0
        %1253 = vperm.xlu0 %1252, %v1219
        %v1254 = vpop.permute.xlu0 %1253
        %1255 = vset.pattern.permute.xlu0 0
        %1256 = vperm.xlu0 %1255, %v1220
        %v1257 = vpop.permute.xlu0 %1256
        %1258 = vset.pattern.permute.xlu0 0
        %1259 = vperm.xlu0 %1258, %v1221
        %v1260 = vpop.permute.xlu0 %1259
        %1261 = vset.pattern.permute.xlu0 0
        %1262 = vperm.xlu0 %1261, %v1222
        %v1263 = vpop.permute.xlu0 %1262
        %1264 = vset.pattern.permute.xlu0 0
        %1265 = vperm.xlu0 %1264, %v1223
        %v1266 = vpop.permute.xlu0 %1265
        %1267 = vset.pattern.permute.xlu0 0
        %1268 = vperm.xlu0 %1267, %v1224
        %v1269 = vpop.permute.xlu0 %1268
        %1270 = vset.pattern.permute.xlu0 0
        %1271 = vperm.xlu0 %1270, %v1225
        %v1272 = vpop.permute.xlu0 %1271
        %1273 = vset.pattern.permute.xlu0 0
        %1274 = vperm.xlu0 %1273, %v1226
        %v1275 = vpop.permute.xlu0 %1274
        %1276 = vset.pattern.permute.xlu0 0
        %1277 = vperm.xlu0 %1276, %v1227
        %v1278 = vpop.permute.xlu0 %1277
        %1279 = vset.pattern.permute.xlu0 0
        %1280 = vperm.xlu0 %1279, %v1228
        %v1281 = vpop.permute.xlu0 %1280
        %1282 = vset.pattern.permute.xlu0 0
        %1283 = vperm.xlu0 %1282, %v1229
        %v1284 = vpop.permute.xlu0 %1283
        %1285 = vset.pattern.permute.xlu0 0
        %1286 = vperm.xlu0 %1285, %v1230
        %v1287 = vpop.permute.xlu0 %1286
        %1288 = vset.pattern.permute.xlu0 0
        %1289 = vperm.xlu0 %1288, %v1231
        %v1290 = vpop.permute.xlu0 %1289
        %1291 = vset.pattern.permute.xlu0 0
        %1292 = vperm.xlu0 %1291, %v1232
        %v1293 = vpop.permute.xlu0 %1292
        %1294 = vset.pattern.permute.xlu0 0
        %1295 = vperm.xlu0 %1294, %v1233
        %v1296 = vpop.permute.xlu0 %1295
        %1297 = vset.pattern.permute.xlu0 0
        %1298 = vperm.xlu0 %1297, %v1234
        %v1299 = vpop.permute.xlu0 %1298
        %1300 = vset.pattern.permute.xlu0 0
        %1301 = vperm.xlu0 %1300, %v1235
        %v1302 = vpop.permute.xlu0 %1301
        %1303 = vset.pattern.permute.xlu0 0
        %1304 = vperm.xlu0 %1303, %v1236
        %v1305 = vpop.permute.xlu0 %1304
        %1306 = vset.pattern.permute.xlu0 0
        %1307 = vperm.xlu0 %1306, %v1237
        %v1308 = vpop.permute.xlu0 %1307
        %1309 = vset.pattern.permute.xlu0 0
        %1310 = vperm.xlu0 %1309, %v1238
        %v1311 = vpop.permute.xlu0 %1310
        %1312 = vset.pattern.permute.xlu0 0
        %1313 = vperm.xlu0 %1312, %v1239
        %v1314 = vpop.permute.xlu0 %1313
        %vm1315 = vcmp.eq.s32.totalorder %v1242, 1
        %vm1316 = vcmp.eq.s32.totalorder %v1245, 1
        %vm1317 = vcmp.eq.s32.totalorder %v1248, 1
        %vm1318 = vcmp.eq.s32.totalorder %v1251, 1
        %vm1319 = vcmp.eq.s32.totalorder %v1254, 1
        %vm1320 = vcmp.eq.s32.totalorder %v1257, 1
        %vm1321 = vcmp.eq.s32.totalorder %v1260, 1
        %vm1322 = vcmp.eq.s32.totalorder %v1263, 1
        %vm1323 = vcmp.eq.s32.totalorder %v1266, 1
        %vm1324 = vcmp.eq.s32.totalorder %v1269, 1
        %vm1325 = vcmp.eq.s32.totalorder %v1272, 1
        %vm1326 = vcmp.eq.s32.totalorder %v1275, 1
        %vm1327 = vcmp.eq.s32.totalorder %v1278, 1
        %vm1328 = vcmp.eq.s32.totalorder %v1281, 1
        %vm1329 = vcmp.eq.s32.totalorder %v1284, 1
        %vm1330 = vcmp.eq.s32.totalorder %v1287, 1
        %vm1331 = vcmp.eq.s32.totalorder %v1290, 1
        %vm1332 = vcmp.eq.s32.totalorder %v1293, 1
        %vm1333 = vcmp.eq.s32.totalorder %v1296, 1
        %vm1334 = vcmp.eq.s32.totalorder %v1299, 1
        %vm1335 = vcmp.eq.s32.totalorder %v1302, 1
        %vm1336 = vcmp.eq.s32.totalorder %v1305, 1
        %vm1337 = vcmp.eq.s32.totalorder %v1308, 1
        %vm1338 = vcmp.eq.s32.totalorder %v1311, 1
        %vm1339 = vcmp.eq.s32.totalorder %v1314, 1
        %v1340 = vsel %vm1315, %v1140, 0.0
        %v1341 = vsel %vm1315, %v1141, 0.0
        %v1342 = vsel %vm1315, %v1142, 0.0
        %v1343 = vsel %vm1316, %v1143, 0.0
        %v1344 = vsel %vm1316, %v1144, 0.0
        %v1345 = vsel %vm1316, %v1145, 0.0
        %v1346 = vsel %vm1317, %v1146, 0.0
        %v1347 = vsel %vm1317, %v1147, 0.0
        %v1348 = vsel %vm1317, %v1148, 0.0
        %v1349 = vsel %vm1318, %v1149, 0.0
        %v1350 = vsel %vm1318, %v1150, 0.0
        %v1351 = vsel %vm1318, %v1151, 0.0
        %v1352 = vsel %vm1319, %v1152, 0.0
        %v1353 = vsel %vm1319, %v1153, 0.0
        %v1354 = vsel %vm1319, %v1154, 0.0
        %v1355 = vsel %vm1320, %v1155, 0.0
        %v1356 = vsel %vm1320, %v1156, 0.0
        %v1357 = vsel %vm1320, %v1157, 0.0
        %v1358 = vsel %vm1321, %v1158, 0.0
        %v1359 = vsel %vm1321, %v1159, 0.0
        %v1360 = vsel %vm1321, %v1160, 0.0
        %v1361 = vsel %vm1322, %v1161, 0.0
        %v1362 = vsel %vm1322, %v1162, 0.0
        %v1363 = vsel %vm1322, %v1163, 0.0
        %v1364 = vsel %vm1323, %v1164, 0.0
        %v1365 = vsel %vm1323, %v1165, 0.0
        %v1366 = vsel %vm1323, %v1166, 0.0
        %v1367 = vsel %vm1324, %v1167, 0.0
        %v1368 = vsel %vm1324, %v1168, 0.0
        %v1369 = vsel %vm1324, %v1169, 0.0
        %v1370 = vsel %vm1325, %v1170, 0.0
        %v1371 = vsel %vm1325, %v1171, 0.0
        %v1372 = vsel %vm1325, %v1172, 0.0
        %v1373 = vsel %vm1326, %v1173, 0.0
        %v1374 = vsel %vm1326, %v1174, 0.0
        %v1375 = vsel %vm1326, %v1175, 0.0
        %v1376 = vsel %vm1327, %v1176, 0.0
        %v1377 = vsel %vm1327, %v1177, 0.0
        %v1378 = vsel %vm1327, %v1178, 0.0
        %v1379 = vsel %vm1328, %v1179, 0.0
        %v1380 = vsel %vm1328, %v1180, 0.0
        %v1381 = vsel %vm1328, %v1181, 0.0
        %v1382 = vsel %vm1329, %v1182, 0.0
        %v1383 = vsel %vm1329, %v1183, 0.0
        %v1384 = vsel %vm1329, %v1184, 0.0
        %v1385 = vsel %vm1330, %v1185, 0.0
        %v1386 = vsel %vm1330, %v1186, 0.0
        %v1387 = vsel %vm1330, %v1187, 0.0
        %v1388 = vsel %vm1331, %v1188, 0.0
        %v1389 = vsel %vm1331, %v1189, 0.0
        %v1390 = vsel %vm1331, %v1190, 0.0
        %v1391 = vsel %vm1332, %v1191, 0.0
        %v1392 = vsel %vm1332, %v1192, 0.0
        %v1393 = vsel %vm1332, %v1193, 0.0
        %v1394 = vsel %vm1333, %v1194, 0.0
        %v1395 = vsel %vm1333, %v1195, 0.0
        %v1396 = vsel %vm1333, %v1196, 0.0
        %v1397 = vsel %vm1334, %v1197, 0.0
        %v1398 = vsel %vm1334, %v1198, 0.0
        %v1399 = vsel %vm1334, %v1199, 0.0
        %v1400 = vsel %vm1335, %v1200, 0.0
        %v1401 = vsel %vm1335, %v1201, 0.0
        %v1402 = vsel %vm1335, %v1202, 0.0
        %v1403 = vsel %vm1336, %v1203, 0.0
        %v1404 = vsel %vm1336, %v1204, 0.0
        %v1405 = vsel %vm1336, %v1205, 0.0
        %v1406 = vsel %vm1337, %v1206, 0.0
        %v1407 = vsel %vm1337, %v1207, 0.0
        %v1408 = vsel %vm1337, %v1208, 0.0
        %v1409 = vsel %vm1338, %v1209, 0.0
        %v1410 = vsel %vm1338, %v1210, 0.0
        %v1411 = vsel %vm1338, %v1211, 0.0
        %v1412 = vsel %vm1339, %v1212, 0.0
        %v1413 = vsel %vm1339, %v1213, 0.0
        %v1414 = vsel %vm1339, %v1214, 0.0
        %v1415 = vadd.f32 %v915, %v1340
        %v1416 = vadd.f32 %v916, %v1341
        %v1417 = vadd.f32 %v917, %v1342
        %v1418 = vadd.f32 %v918, %v1343
        %v1419 = vadd.f32 %v919, %v1344
        %v1420 = vadd.f32 %v920, %v1345
        %v1421 = vadd.f32 %v921, %v1346
        %v1422 = vadd.f32 %v922, %v1347
        %v1423 = vadd.f32 %v923, %v1348
        %v1424 = vadd.f32 %v924, %v1349
        %v1425 = vadd.f32 %v925, %v1350
        %v1426 = vadd.f32 %v926, %v1351
        %v1427 = vadd.f32 %v927, %v1352
        %v1428 = vadd.f32 %v928, %v1353
        %v1429 = vadd.f32 %v929, %v1354
        %v1430 = vadd.f32 %v930, %v1355
        %v1431 = vadd.f32 %v931, %v1356
        %v1432 = vadd.f32 %v932, %v1357
        %v1433 = vadd.f32 %v933, %v1358
        %v1434 = vadd.f32 %v934, %v1359
        %v1435 = vadd.f32 %v935, %v1360
        %v1436 = vadd.f32 %v936, %v1361
        %v1437 = vadd.f32 %v937, %v1362
        %v1438 = vadd.f32 %v938, %v1363
        %v1439 = vadd.f32 %v939, %v1364
        %v1440 = vadd.f32 %v940, %v1365
        %v1441 = vadd.f32 %v941, %v1366
        %v1442 = vadd.f32 %v942, %v1367
        %v1443 = vadd.f32 %v943, %v1368
        %v1444 = vadd.f32 %v944, %v1369
        %v1445 = vadd.f32 %v945, %v1370
        %v1446 = vadd.f32 %v946, %v1371
        %v1447 = vadd.f32 %v947, %v1372
        %v1448 = vadd.f32 %v948, %v1373
        %v1449 = vadd.f32 %v949, %v1374
        %v1450 = vadd.f32 %v950, %v1375
        %v1451 = vadd.f32 %v951, %v1376
        %v1452 = vadd.f32 %v952, %v1377
        %v1453 = vadd.f32 %v953, %v1378
        %v1454 = vadd.f32 %v954, %v1379
        %v1455 = vadd.f32 %v955, %v1380
        %v1456 = vadd.f32 %v956, %v1381
        %v1457 = vadd.f32 %v957, %v1382
        %v1458 = vadd.f32 %v958, %v1383
        %v1459 = vadd.f32 %v959, %v1384
        %v1460 = vadd.f32 %v960, %v1385
        %v1461 = vadd.f32 %v961, %v1386
        %v1462 = vadd.f32 %v962, %v1387
        %v1463 = vadd.f32 %v963, %v1388
        %v1464 = vadd.f32 %v964, %v1389
        %v1465 = vadd.f32 %v965, %v1390
        %v1466 = vadd.f32 %v966, %v1391
        %v1467 = vadd.f32 %v967, %v1392
        %v1468 = vadd.f32 %v968, %v1393
        %v1469 = vadd.f32 %v969, %v1394
        %v1470 = vadd.f32 %v970, %v1395
        %v1471 = vadd.f32 %v971, %v1396
        %v1472 = vadd.f32 %v972, %v1397
        %v1473 = vadd.f32 %v973, %v1398
        %v1474 = vadd.f32 %v974, %v1399
        %v1475 = vadd.f32 %v975, %v1400
        %v1476 = vadd.f32 %v976, %v1401
        %v1477 = vadd.f32 %v977, %v1402
        %v1478 = vadd.f32 %v978, %v1403
        %v1479 = vadd.f32 %v979, %v1404
        %v1480 = vadd.f32 %v980, %v1405
        %v1481 = vadd.f32 %v981, %v1406
        %v1482 = vadd.f32 %v982, %v1407
        %v1483 = vadd.f32 %v983, %v1408
        %v1484 = vadd.f32 %v984, %v1409
        %v1485 = vadd.f32 %v985, %v1410
        %v1486 = vadd.f32 %v986, %v1411
        %v1487 = vadd.f32 %v987, %v1412
        %v1488 = vadd.f32 %v988, %v1413
        %v1489 = vadd.f32 %v989, %v1414
        %1490 = vst [vmem:[#allocation5] sm:$0xff] %v1415
        %1491 = vst [vmem:[#allocation5 + $0x8] sm:$0xff] %v1416
        %1492 = vst [vmem:[#allocation5 + $0x10] sm:$0xff] %v1417
        %1493 = vst [vmem:[#allocation5 + $0x18] sm:$0xff] %v1418
        %1494 = vst [vmem:[#allocation5 + $0x20] sm:$0xff] %v1419
        %1495 = vst [vmem:[#allocation5 + $0x28] sm:$0xff] %v1420
        %1496 = vst [vmem:[#allocation5 + $0x30] sm:$0xff] %v1421
        %1497 = vst [vmem:[#allocation5 + $0x38] sm:$0xff] %v1422
        %1498 = vst [vmem:[#allocation5 + $0x40] sm:$0xff] %v1423
        %1499 = vst [vmem:[#allocation5 + $0x48] sm:$0xff] %v1424
        %1500 = vst [vmem:[#allocation5 + $0x50] sm:$0xff] %v1425
        %1501 = vst [vmem:[#allocation5 + $0x58] sm:$0xff] %v1426
        %1502 = vst [vmem:[#allocation5 + $0x60] sm:$0xff] %v1427
        %1503 = vst [vmem:[#allocation5 + $0x68] sm:$0xff] %v1428
        %1504 = vst [vmem:[#allocation5 + $0x70] sm:$0xff] %v1429
        %1505 = vst [vmem:[#allocation5 + $0x78] sm:$0xff] %v1430
        %1506 = vst [vmem:[#allocation5 + $0x80] sm:$0xff] %v1431
        %1507 = vst [vmem:[#allocation5 + $0x88] sm:$0xff] %v1432
        %1508 = vst [vmem:[#allocation5 + $0x90] sm:$0xff] %v1433
        %1509 = vst [vmem:[#allocation5 + $0x98] sm:$0xff] %v1434
        %1510 = vst [vmem:[#allocation5 + $0xa0] sm:$0xff] %v1435
        %1511 = vst [vmem:[#allocation5 + $0xa8] sm:$0xff] %v1436
        %1512 = vst [vmem:[#allocation5 + $0xb0] sm:$0xff] %v1437
        %1513 = vst [vmem:[#allocation5 + $0xb8] sm:$0xff] %v1438
        %1514 = vst [vmem:[#allocation5 + $0xc0] sm:$0xff] %v1439
        %1515 = vst [vmem:[#allocation5 + $0xc8] sm:$0xff] %v1440
        %1516 = vst [vmem:[#allocation5 + $0xd0] sm:$0xff] %v1441
        %1517 = vst [vmem:[#allocation5 + $0xd8] sm:$0xff] %v1442
        %1518 = vst [vmem:[#allocation5 + $0xe0] sm:$0xff] %v1443
        %1519 = vst [vmem:[#allocation5 + $0xe8] sm:$0xff] %v1444
        %1520 = vst [vmem:[#allocation5 + $0xf0] sm:$0xff] %v1445
        %1521 = vst [vmem:[#allocation5 + $0xf8] sm:$0xff] %v1446
        %1522 = vst [vmem:[#allocation5 + $0x100] sm:$0xff] %v1447
        %1523 = vst [vmem:[#allocation5 + $0x108] sm:$0xff] %v1448
        %1524 = vst [vmem:[#allocation5 + $0x110] sm:$0xff] %v1449
        %1525 = vst [vmem:[#allocation5 + $0x118] sm:$0xff] %v1450
        %1526 = vst [vmem:[#allocation5 + $0x120] sm:$0xff] %v1451
        %1527 = vst [vmem:[#allocation5 + $0x128] sm:$0xff] %v1452
        %1528 = vst [vmem:[#allocation5 + $0x130] sm:$0xff] %v1453
        %1529 = vst [vmem:[#allocation5 + $0x138] sm:$0xff] %v1454
        %1530 = vst [vmem:[#allocation5 + $0x140] sm:$0xff] %v1455
        %1531 = vst [vmem:[#allocation5 + $0x148] sm:$0xff] %v1456
        %1532 = vst [vmem:[#allocation5 + $0x150] sm:$0xff] %v1457
        %1533 = vst [vmem:[#allocation5 + $0x158] sm:$0xff] %v1458
        %1534 = vst [vmem:[#allocation5 + $0x160] sm:$0xff] %v1459
        %1535 = vst [vmem:[#allocation5 + $0x168] sm:$0xff] %v1460
        %1536 = vst [vmem:[#allocation5 + $0x170] sm:$0xff] %v1461
        %1537 = vst [vmem:[#allocation5 + $0x178] sm:$0xff] %v1462
        %1538 = vst [vmem:[#allocation5 + $0x180] sm:$0xff] %v1463
        %1539 = vst [vmem:[#allocation5 + $0x188] sm:$0xff] %v1464
        %1540 = vst [vmem:[#allocation5 + $0x190] sm:$0xff] %v1465
        %1541 = vst [vmem:[#allocation5 + $0x198] sm:$0xff] %v1466
        %1542 = vst [vmem:[#allocation5 + $0x1a0] sm:$0xff] %v1467
        %1543 = vst [vmem:[#allocation5 + $0x1a8] sm:$0xff] %v1468
        %1544 = vst [vmem:[#allocation5 + $0x1b0] sm:$0xff] %v1469
        %1545 = vst [vmem:[#allocation5 + $0x1b8] sm:$0xff] %v1470
        %1546 = vst [vmem:[#allocation5 + $0x1c0] sm:$0xff] %v1471
        %1547 = vst [vmem:[#allocation5 + $0x1c8] sm:$0xff] %v1472
        %1548 = vst [vmem:[#allocation5 + $0x1d0] sm:$0xff] %v1473
        %1549 = vst [vmem:[#allocation5 + $0x1d8] sm:$0xff] %v1474
        %1550 = vst [vmem:[#allocation5 + $0x1e0] sm:$0xff] %v1475
        %1551 = vst [vmem:[#allocation5 + $0x1e8] sm:$0xff] %v1476
        %1552 = vst [vmem:[#allocation5 + $0x1f0] sm:$0xff] %v1477
        %1553 = vst [vmem:[#allocation5 + $0x1f8] sm:$0xff] %v1478
        %1554 = vst [vmem:[#allocation5 + $0x200] sm:$0xff] %v1479
        %1555 = vst [vmem:[#allocation5 + $0x208] sm:$0xff] %v1480
        %1556 = vst [vmem:[#allocation5 + $0x210] sm:$0xff] %v1481
        %1557 = vst [vmem:[#allocation5 + $0x218] sm:$0xff] %v1482
        %1558 = vst [vmem:[#allocation5 + $0x220] sm:$0xff] %v1483
        %1559 = vst [vmem:[#allocation5 + $0x228] sm:$0xff] %v1484
        %1560 = vst [vmem:[#allocation5 + $0x230] sm:$0xff] %v1485
        %1561 = vst [vmem:[#allocation5 + $0x238] sm:$0xff] %v1486
        %1562 = vst [vmem:[#allocation5 + $0x240] sm:$0xff] %v1487
        %1563 = vst [vmem:[#allocation5 + $0x248] sm:$0xff] %v1488
        %1564 = vst [vmem:[#allocation5 + $0x250] sm:$0xff] %v1489
        // Predicated region
        $region45: #{tpu_custom_call.1} parent=35 // pred_check
          %p1565 = pneg %p166
        $region46: #{tpu_custom_call.1} parent=35 // pred_check_branch
          %1567 = sbr.rel (%p1565) target = $region48
        $region47: #{tpu_custom_call.1} parent=35 // pred_region
          %s1568 = smul.u32 25, %s22
          %s1569 = smul.u32 3, %s23
          %1571 = vsyncadd [#allocation4], 0
          %s1572 = smul.addr %s1568, 3
          %s1573 = sadd.s32 %s1569, %s1572
          %s1574 = smul.addr %s1573, 8
          %s1575 = scalar_lea.hbm %s4, %s1574
          %s1576 = sshll.u32 [#allocation5], 4
          %s1577 = int_to_ptr.vmem [resolvable:$true] %s1576
          %s1578 = sshll.u32 %s1575, 4
          %s1579 = int_to_ptr.hbm [resolvable:$true] %s1578
          %1584 = dma.vmem_to_hbm [thread:$0]  %s1577, 9600, %s1579, [#allocation4], 384, 384, 24
        $region48: #{tpu_custom_call.1} parent=35 // pred_fallthru
          _
        // Predicated region
        $region49: #{tpu_custom_call.1} parent=35 // pred_check
          %p1585 = pneg %p166
        $region50: #{tpu_custom_call.1} parent=35 // pred_check_branch
          %1587 = sbr.rel (%p1585) target = $region52
        $region51: #{tpu_custom_call.1} parent=35 // pred_region
          %1589 = dma.done [#allocation4], 9600
        $region52: #{tpu_custom_call.1} parent=35 // pred_fallthru
          _
      $region36: #{tpu_custom_call.1} parent=5 // pred_fallthru
        _
      %p1590 = scmp.le.s32.totalorder 2, %s12
      // Predicated region
      $region53: #{tpu_custom_call.1} parent=5 // pred_check
        %p1591 = pneg %p1590
      $region54: #{tpu_custom_call.1} parent=5 // pred_check_branch
        %1593 = sbr.rel (%p1591) target = $region56
      $region55: #{tpu_custom_call.1} parent=5 // pred_region
        %s1594 = ssub.s32 %s12, 2
      $region56: #{tpu_custom_call.1} parent=5 // pred_fallthru
        _
    $region6: #{tpu_custom_call.1} parent=1 // loop_footer
      %s16 = sadd.s32 1, %s12
    $region7: #{tpu_custom_call.1} parent=1 // loop_footer_branch
      %11 = sbr.rel target = $region3
    $region8: #{tpu_custom_call.1} parent=1 // loop_exit
      _
    %1595 = vsyncpa [#allocation3], 1
    %s1596 = scalar_lea.sflag [#allocation3], 1
    %1597 = vsyncpa %s1596, 1
    %1598 = vsyncpa [#allocation4], 1
    %s1599 = scalar_lea.sflag [#allocation4], 1
    %1600 = vsyncpa %s1599, 1

</llo_original>
